<compile_context>
chip_gen: v7x
topology: tpu7x:2x2x1
jax: 0.10.0
libtpu: 0.0.40
codegen_flags: <defaults>
</compile_context>

<pallas_src>
import jax
import jax.numpy as jnp
from jax.experimental import pallas as pl
from jax.experimental.pallas import tpu as pltpu

# Large-but-finite "masked out" value: keeps exp/corr arithmetic NaN-free even
# for fully-masked tiles, and is representable in bf16.
_MASK_PAD = -1.0e30


def _round_up(x, m):
    return ((x + m - 1) // m) * m


def _vmem_capacity_bytes():
    # v7x: 64 MiB per TensorCore; v5e/v6e: 128 MiB. Query when possible and
    # fall back to the smallest (v7x) so the sizing is always safe.
    try:
        info = pltpu.get_tpu_info()
        cap = getattr(info, "vmem_capacity_bytes", None)
        if cap:
            return int(cap)
    except Exception:
        pass
    return 64 << 20


def _make_kernel(has_mask: bool):
    def kernel(*refs):
        if has_mask:
            (wh_ref, p_ref, feats_ref, mask_ref, wa_ref,
             out_ref, m_sc, d_sc, acc_sc) = refs
        else:
            (wh_ref, p_ref, feats_ref, wa_ref,
             out_ref, m_sc, d_sc, acc_sc) = refs
            mask_ref = None

        mi = pl.program_id(1)

        @pl.when(mi == 0)
        def _():
            m_sc[...] = jnp.full(m_sc.shape, _MASK_PAD, jnp.float32)
            d_sc[...] = jnp.zeros(d_sc.shape, jnp.float32)
            acc_sc[...] = jnp.zeros(acc_sc.shape, jnp.float32)

        # relu(W_h h + p) in the native input dtype (bf16 VPU on v6e/v7x;
        # v5e widens to f32 in vregs either way).
        # TODO(synk): att_embed_dropout is train-mode only; eval forward skips it.
        wh = wh_ref[...]                                            # [TB, E]
        e = jnp.maximum(wh[:, None, :] + p_ref[...], 0)             # [TB, TM, E]

        # score[b,m] = sum_e e[b,m,e] * W_alpha[e]: multiply stays in the
        # native dtype; accumulate in f32 (no full-tile f32 upcast of `e`).
        s = jnp.sum(e * wa_ref[...], axis=-1, dtype=jnp.float32)    # [TB, TM]
        if mask_ref is not None:
            s = s + mask_ref[...].astype(jnp.float32)

        # --- online softmax over the region axis -----------------------------
        m_prev = m_sc[...]                                          # [TB, 1]
        m_new = jnp.maximum(m_prev, jnp.max(s, axis=-1, keepdims=True))
        corr = jnp.exp(m_prev - m_new)                              # [TB, 1]
        p = jnp.exp(s - m_new)                                      # [TB, TM]
        d_sc[...] = corr * d_sc[...] + jnp.sum(p, axis=-1, keepdims=True)

        # Weighted-feature contraction over M on the MXU (batched matmul);
        # unnormalized weights, feats in native dtype at the MXU input.
        pv = jnp.einsum('bqm,bmd->bqd',
                        p[:, None, :].astype(feats_ref.dtype),
                        feats_ref[...],
                        preferred_element_type=jnp.float32)         # [TB, 1, D]
        acc_sc[...] = corr[:, :, None] * acc_sc[...] + pv
        m_sc[...] = m_new

        @pl.when(mi == pl.num_programs(1) - 1)
        def _():
            # Single D-wide scale by 1/denominator (instead of an M-wide divide
            # per tile). pl.reciprocal(..., approx=True) could be used here if
            # a looser tolerance is acceptable.
            inv = 1.0 / d_sc[...]                                   # [TB, 1]
            att = acc_sc[...][:, 0, :] * inv                        # [TB, D]
            out_ref[...] = att.astype(out_ref.dtype)

    return kernel


def base_attention(hidden_states, att_feats, p_att_feats, att_masks,
                   w_h_weight, w_alpha_weight, *, batch_tile=None, m_tile=None):
    """Pallas forward of BaseAttention.

    hidden_states: [B, H], att_feats: [B, M, D], p_att_feats: [B, M, E],
    att_masks: [B, M] additive mask or None,
    w_h_weight: [E, H], w_alpha_weight: [1, E] (torch Linear weight layouts).
    Returns: [B, D]
    """
    B, H = hidden_states.shape
    _, M, D = att_feats.shape
    E = p_att_feats.shape[-1]
    out_dtype = att_feats.dtype
    cdtype = p_att_feats.dtype
    itemsize = jnp.dtype(cdtype).itemsize

    # Hoist the hidden projection: one dense [B,H]x[H,E] MXU matmul in XLA.
    w_h_all = jnp.dot(hidden_states, w_h_weight.T,
                      preferred_element_type=jnp.float32).astype(cdtype)   # [B, E]
    wa = w_alpha_weight.astype(cdtype)                                     # [1, E]

    has_mask = att_masks is not None

    # ---- per-generation VMEM sizing ----------------------------------------
    vmem_cap = _vmem_capacity_bytes()          # 64 MiB (v7x) .. 128 MiB (v5e/v6e)
    budget = vmem_cap // 2                     # live pipeline blocks + temps
    vmem_limit = int(min((vmem_cap * 3) // 4, vmem_cap - (8 << 20)))

    # Sublane packing of the batch axis: 8 rows for 4-byte, 16 for 2-byte dtypes.
    row_align = max(8, 32 // max(itemsize, 1))

    # Per-batch-row VMEM bytes for one M tile: double-buffered input blocks plus
    # in-kernel temporaries (budgeted at f32 width so the estimate holds on v5e).
    def per_row_bytes(tm):
        blocks = 2 * (tm * E + tm * D + (tm if has_mask else 0) + E + D) * itemsize
        temps = 4 * (tm * E + 4 * tm + 3 * D + 8)
        return blocks + temps

    # ---- choose the M tile ---------------------------------------------------
    if m_tile is None:
        if per_row_bytes(M) * row_align <= budget:
            m_tile = M                                    # whole region axis
        else:
            a = per_row_bytes(1) - per_row_bytes(0)
            c = per_row_bytes(0)
            tm_max = max(128, (budget // row_align - c) // max(a, 1))
            m_tile = max(128, (tm_max // 128) * 128)      # lane-dense M tiles
            m_tile = min(m_tile, _round_up(M, 128))
    TM = int(m_tile)
    num_m = pl.cdiv(M, TM)
    M_pad = num_m * TM

    # ---- choose the batch tile -----------------------------------------------
    if batch_tile is None:
        cap = max(row_align,
                  (budget // max(per_row_bytes(TM), 1)) // row_align * row_align)
        tb = min(cap, _round_up(B, row_align))
        # Keep >= 2 steps on the parallel batch axis when possible (v7x megacore).
        if tb >= B and B >= 2 * row_align:
            tb = _round_up(pl.cdiv(B, 2), row_align)
        batch_tile = tb
    TB = int(batch_tile)
    num_b = pl.cdiv(B, TB)
    B_pad = num_b * TB

    # ---- host-side padding ---------------------------------------------------
    pad_b = B_pad - B
    pad_m = M_pad - M
    if pad_b or pad_m:
        w_h_all = jnp.pad(w_h_all, ((0, pad_b), (0, 0)))
        p_att_feats = jnp.pad(p_att_feats, ((0, pad_b), (0, pad_m), (0, 0)))
        att_feats = jnp.pad(att_feats, ((0, pad_b), (0, pad_m), (0, 0)))

    if has_mask:
        mask = att_masks.astype(cdtype)
        if pad_b or pad_m:
            mask = jnp.pad(mask, ((0, pad_b), (0, pad_m)),
                           constant_values=_MASK_PAD)
    elif pad_m:
        # M padding needs a mask so softmax mass can't leak into padded regions.
        has_mask = True
        mask = jnp.zeros((B_pad, M_pad), dtype=cdtype).at[:, M:].set(_MASK_PAD)
    else:
        mask = None

    # ---- kernel --------------------------------------------------------------
    kernel = _make_kernel(has_mask)

    in_specs = [
        pl.BlockSpec((TB, E), lambda b, m: (b, 0)),          # hidden projection
        pl.BlockSpec((TB, TM, E), lambda b, m: (b, m, 0)),   # p_att_feats
        pl.BlockSpec((TB, TM, D), lambda b, m: (b, m, 0)),   # att_feats
    ]
    inputs = [w_h_all, p_att_feats, att_feats]
    if has_mask:
        in_specs.append(pl.BlockSpec((TB, TM), lambda b, m: (b, m)))
        inputs.append(mask)
    in_specs.append(pl.BlockSpec((1, E), lambda b, m: (0, 0)))  # W_alpha (shared)
    inputs.append(wa)

    out = pl.pallas_call(
        kernel,
        out_shape=jax.ShapeDtypeStruct((B_pad, D), out_dtype),
        grid_spec=pltpu.PrefetchScalarGridSpec(
            num_scalar_prefetch=0,
            grid=(num_b, num_m),
            in_specs=in_specs,
            out_specs=pl.BlockSpec((TB, D), lambda b, m: (b, 0)),
            scratch_shapes=[
                pltpu.VMEM((TB, 1), jnp.float32),      # running max
                pltpu.VMEM((TB, 1), jnp.float32),      # running denominator
                pltpu.VMEM((TB, 1, D), jnp.float32),   # weighted-feature acc
            ],
        ),
        compiler_params=pltpu.CompilerParams(
            dimension_semantics=("parallel", "arbitrary"),
            vmem_limit_bytes=vmem_limit),
    )(*inputs)

    return out[:B]


def reference(hidden_states, att_feats, p_att_feats, att_masks, Wh, Wa):
    w_h = hidden_states @ Wh.T                                       # [B, E]
    alpha = jax.nn.relu(w_h[:, None, :] + p_att_feats)               # [B, M, E]
    alpha = jnp.squeeze(alpha @ Wa.T, -1)                            # [B, M]
    if att_masks is not None:
        alpha = alpha + att_masks
    alpha = jax.nn.softmax(alpha, axis=-1)
    return jnp.einsum('bm,bmd->bd', alpha, att_feats)                # [B, D]


if __name__ == "__main__":
    B, H, E, M, D = 2, 32, 32, 8, 16

    key = jax.random.PRNGKey(0)
    k1, k2, k3, k4, k5 = jax.random.split(key, 5)

    hidden_states = jax.random.normal(k1, (B, H), dtype=jnp.float32)
    att_feats = jax.random.normal(k2, (B, M, D), dtype=jnp.float32)
    p_att_feats = jax.random.normal(k3, (B, M, E), dtype=jnp.float32)
    # additive mask: last two regions of batch 1 masked out
    valid = jnp.ones((B, M), dtype=jnp.float32).at[1, 6:].set(0.0)
    att_masks = (valid - 1.0) * 1e9

    # deterministic parameter init (torch Linear weight layouts)
    w_h_weight = 0.1 * jax.random.normal(k4, (E, H), dtype=jnp.float32)      # Linear(H, E).weight
    w_alpha_weight = 0.1 * jax.random.normal(k5, (1, E), dtype=jnp.float32)  # Linear(E, 1).weight

    # masked variant
    out = base_attention(hidden_states, att_feats, p_att_feats, att_masks,
                         w_h_weight, w_alpha_weight)
    out = jax.block_until_ready(out)
    ref = reference(hidden_states, att_feats, p_att_feats, att_masks,
                    w_h_weight, w_alpha_weight)
    assert out.shape == (B, D)
    assert jnp.allclose(out, ref, rtol=1e-5, atol=1e-5), (out, ref)

    # mask-free variant (separate compiled kernel, no zero-mask HBM stream)
    out_nm = base_attention(hidden_states, att_feats, p_att_feats, None,
                            w_h_weight, w_alpha_weight)
    out_nm = jax.block_until_ready(out_nm)
    ref_nm = reference(hidden_states, att_feats, p_att_feats, None,
                       w_h_weight, w_alpha_weight)
    assert jnp.allclose(out_nm, ref_nm, rtol=1e-5, atol=1e-5), (out_nm, ref_nm)

    print("KERNEL_OK")
</pallas_src>

<mosaic_0001>
module attributes {stable_mosaic.version = 11 : i64} {
  func.func @kernel(%arg0: i32, %arg1: i32, %arg2: memref<8x32xf32, #tpu.memory_space<vmem>>, %arg3: memref<8x8x32xf32, #tpu.memory_space<vmem>>, %arg4: memref<8x8x16xf32, #tpu.memory_space<vmem>>, %arg5: memref<8x8xf32, #tpu.memory_space<vmem>>, %arg6: memref<1x32xf32, #tpu.memory_space<vmem>>, %arg7: memref<8x16xf32, #tpu.memory_space<vmem>>, %arg8: memref<8x1xf32, #tpu.memory_space<vmem>>, %arg9: memref<8x1xf32, #tpu.memory_space<vmem>>, %arg10: memref<8x1x16xf32, #tpu.memory_space<vmem>>) attributes {dimension_semantics = [#tpu.dimension_semantics<parallel>, #tpu.dimension_semantics<arbitrary>], iteration_bounds = array<i64: 1, 1>, scalar_prefetch = 0 : i64, scratch_operands = 3 : i64, tpu.core_type = #tpu.core_type<tc>, window_params = [{transform_indices = @transform_0, window_bounds = array<i64: 8, 32>}, {transform_indices = @transform_1, window_bounds = array<i64: 8, 8, 32>}, {transform_indices = @transform_2, window_bounds = array<i64: 8, 8, 16>}, {transform_indices = @transform_3, window_bounds = array<i64: 8, 8>}, {pipeline_mode = #tpu.pipeline_mode<synchronous>, transform_indices = @transform_4, window_bounds = array<i64: 1, 32>}, {transform_indices = @transform_5, window_bounds = array<i64: 8, 16>}]} {
    %c0_i32 = arith.constant 0 : i32
    %0 = arith.cmpi eq, %arg1, %c0_i32 : i32
    %1 = arith.extui %0 : i1 to i32
    %c0_i32_0 = arith.constant 0 : i32
    %2 = arith.cmpi ne, %1, %c0_i32_0 : i32
    scf.if %2 {
      %cst_32 = arith.constant -1.000000e+30 : f32
      %45 = vector.broadcast %cst_32 : f32 to vector<8x1xf32>
      %c0_33 = arith.constant 0 : index
      %c0_34 = arith.constant 0 : index
      %46 = vector.load %arg8[%c0_33, %c0_34] : memref<8x1xf32, #tpu.memory_space<vmem>>, vector<8x1xf32>
      tpu.vector_store %arg8[%c0_33, %c0_34], %45 {strides = array<i32>} : memref<8x1xf32, #tpu.memory_space<vmem>>, vector<8x1xf32>,
      %cst_35 = arith.constant 0.000000e+00 : f32
      %47 = vector.broadcast %cst_35 : f32 to vector<8x1xf32>
      %c0_36 = arith.constant 0 : index
      %c0_37 = arith.constant 0 : index
      %48 = vector.load %arg9[%c0_36, %c0_37] : memref<8x1xf32, #tpu.memory_space<vmem>>, vector<8x1xf32>
      tpu.vector_store %arg9[%c0_36, %c0_37], %47 {strides = array<i32>} : memref<8x1xf32, #tpu.memory_space<vmem>>, vector<8x1xf32>,
      %cst_38 = arith.constant 0.000000e+00 : f32
      %49 = vector.broadcast %cst_38 : f32 to vector<8x1x16xf32>
      %c0_39 = arith.constant 0 : index
      %c0_40 = arith.constant 0 : index
      %c0_41 = arith.constant 0 : index
      %50 = vector.load %arg10[%c0_39, %c0_40, %c0_41] : memref<8x1x16xf32, #tpu.memory_space<vmem>>, vector<8x1x16xf32>
      tpu.vector_store %arg10[%c0_39, %c0_40, %c0_41], %49 {strides = array<i32>} : memref<8x1x16xf32, #tpu.memory_space<vmem>>, vector<8x1x16xf32>,
    } else {
    }
    %c0 = arith.constant 0 : index
    %c0_1 = arith.constant 0 : index
    %3 = vector.load %arg2[%c0, %c0_1] : memref<8x32xf32, #tpu.memory_space<vmem>>, vector<8x32xf32>
    %4 = vector.shape_cast %3 : vector<8x32xf32> to vector<8x1x32xf32>
    %c0_2 = arith.constant 0 : index
    %c0_3 = arith.constant 0 : index
    %c0_4 = arith.constant 0 : index
    %5 = vector.load %arg3[%c0_2, %c0_3, %c0_4] : memref<8x8x32xf32, #tpu.memory_space<vmem>>, vector<8x8x32xf32>
    %6 = vector.broadcast %4 : vector<8x1x32xf32> to vector<8x8x32xf32>
    %7 = arith.addf %6, %5 : vector<8x8x32xf32>
    %cst = arith.constant 0.000000e+00 : f32
    %8 = vector.broadcast %cst : f32 to vector<8x8x32xf32>
    %9 = arith.maximumf %7, %8 : vector<8x8x32xf32>
    %c0_5 = arith.constant 0 : index
    %c0_6 = arith.constant 0 : index
    %10 = vector.load %arg6[%c0_5, %c0_6] : memref<1x32xf32, #tpu.memory_space<vmem>>, vector<1x32xf32>
    %11 = vector.shape_cast %10 : vector<1x32xf32> to vector<1x1x32xf32>
    %12 = vector.broadcast %11 : vector<1x1x32xf32> to vector<8x8x32xf32>
    %13 = arith.mulf %9, %12 : vector<8x8x32xf32>
    %cst_7 = arith.constant dense<0.000000e+00> : vector<8x8xf32>
    %14 = vector.multi_reduction <add>, %13, %cst_7 [2] : vector<8x8x32xf32> to vector<8x8xf32>
    %c0_8 = arith.constant 0 : index
    %c0_9 = arith.constant 0 : index
    %15 = vector.load %arg5[%c0_8, %c0_9] : memref<8x8xf32, #tpu.memory_space<vmem>>, vector<8x8xf32>
    %16 = arith.addf %14, %15 : vector<8x8xf32>
    %c0_10 = arith.constant 0 : index
    %c0_11 = arith.constant 0 : index
    %17 = vector.load %arg8[%c0_10, %c0_11] : memref<8x1xf32, #tpu.memory_space<vmem>>, vector<8x1xf32>
    %cst_12 = arith.constant dense<0xFF800000> : vector<8xf32>
    %18 = vector.multi_reduction <maximumf>, %16, %cst_12 [1] : vector<8x8xf32> to vector<8xf32>
    %19 = vector.shape_cast %18 : vector<8xf32> to vector<8x1xf32>
    %20 = arith.maximumf %17, %19 : vector<8x1xf32>
    %21 = arith.subf %17, %20 : vector<8x1xf32>
    %22 = math.exp %21 : vector<8x1xf32>
    %23 = vector.broadcast %20 : vector<8x1xf32> to vector<8x8xf32>
    %24 = arith.subf %16, %23 : vector<8x8xf32>
    %25 = math.exp %24 : vector<8x8xf32>
    %c0_13 = arith.constant 0 : index
    %c0_14 = arith.constant 0 : index
    %26 = vector.load %arg9[%c0_13, %c0_14] : memref<8x1xf32, #tpu.memory_space<vmem>>, vector<8x1xf32>
    %27 = arith.mulf %22, %26 : vector<8x1xf32>
    %cst_15 = arith.constant dense<0.000000e+00> : vector<8xf32>
    %28 = vector.multi_reduction <add>, %25, %cst_15 [1] : vector<8x8xf32> to vector<8xf32>
    %29 = vector.shape_cast %28 : vector<8xf32> to vector<8x1xf32>
    %30 = arith.addf %27, %29 : vector<8x1xf32>
    %c0_16 = arith.constant 0 : index
    %c0_17 = arith.constant 0 : index
    %31 = vector.load %arg9[%c0_16, %c0_17] : memref<8x1xf32, #tpu.memory_space<vmem>>, vector<8x1xf32>
    tpu.vector_store %arg9[%c0_16, %c0_17], %30 {strides = array<i32>} : memref<8x1xf32, #tpu.memory_space<vmem>>, vector<8x1xf32>,
    %32 = vector.shape_cast %25 : vector<8x8xf32> to vector<8x1x8xf32>
    %c0_18 = arith.constant 0 : index
    %c0_19 = arith.constant 0 : index
    %c0_20 = arith.constant 0 : index
    %33 = vector.load %arg4[%c0_18, %c0_19, %c0_20] : memref<8x8x16xf32, #tpu.memory_space<vmem>>, vector<8x8x16xf32>
    "tpu.trace_start"() <{level = 10 : i32, message = "bqm,bmd->bqd"}> : () -> ()
    %cst_21 = arith.constant dense<0.000000e+00> : vector<8x1x16xf32>
    %34 = tpu.matmul %32, %33, %cst_21 {dimension_numbers = #tpu.dot_dimension_numbers<[2], [1], [1], [2], [0, 0, 0, 1, 1, 2], [0], [0]>} : vector<8x1x8xf32>, vector<8x8x16xf32>, vector<8x1x16xf32> -> vector<8x1x16xf32>
    "tpu.trace_stop"() : () -> ()
    %35 = vector.shape_cast %22 : vector<8x1xf32> to vector<8x1x1xf32>
    %c0_22 = arith.constant 0 : index
    %c0_23 = arith.constant 0 : index
    %c0_24 = arith.constant 0 : index
    %36 = vector.load %arg10[%c0_22, %c0_23, %c0_24] : memref<8x1x16xf32, #tpu.memory_space<vmem>>, vector<8x1x16xf32>
    %37 = vector.broadcast %35 : vector<8x1x1xf32> to vector<8x1x16xf32>
    %38 = arith.mulf %37, %36 : vector<8x1x16xf32>
    %39 = arith.addf %38, %34 : vector<8x1x16xf32>
    %c0_25 = arith.constant 0 : index
    %c0_26 = arith.constant 0 : index
    %c0_27 = arith.constant 0 : index
    %40 = vector.load %arg10[%c0_25, %c0_26, %c0_27] : memref<8x1x16xf32, #tpu.memory_space<vmem>>, vector<8x1x16xf32>
    tpu.vector_store %arg10[%c0_25, %c0_26, %c0_27], %39 {strides = array<i32>} : memref<8x1x16xf32, #tpu.memory_space<vmem>>, vector<8x1x16xf32>,
    %c0_28 = arith.constant 0 : index
    %c0_29 = arith.constant 0 : index
    %41 = vector.load %arg8[%c0_28, %c0_29] : memref<8x1xf32, #tpu.memory_space<vmem>>, vector<8x1xf32>
    tpu.vector_store %arg8[%c0_28, %c0_29], %20 {strides = array<i32>} : memref<8x1xf32, #tpu.memory_space<vmem>>, vector<8x1xf32>,
    %c0_i32_30 = arith.constant 0 : i32
    %42 = arith.cmpi eq, %arg1, %c0_i32_30 : i32
    %43 = arith.extui %42 : i1 to i32
    %c0_i32_31 = arith.constant 0 : i32
    %44 = arith.cmpi ne, %43, %c0_i32_31 : i32
    scf.if %44 {
      %c0_32 = arith.constant 0 : index
      %c0_33 = arith.constant 0 : index
      %45 = vector.load %arg9[%c0_32, %c0_33] : memref<8x1xf32, #tpu.memory_space<vmem>>, vector<8x1xf32>
      %cst_34 = arith.constant 1.000000e+00 : f32
      %46 = vector.broadcast %cst_34 : f32 to vector<8x1xf32>
      %47 = arith.divf %46, %45 : vector<8x1xf32>
      %c0_35 = arith.constant 0 : index
      %c0_36 = arith.constant 0 : index
      %c0_37 = arith.constant 0 : index
      %48 = vector.load %arg10[%c0_35, %c0_36, %c0_37] : memref<8x1x16xf32, #tpu.memory_space<vmem>>, vector<8x1x16xf32>
      %49 = vector.shape_cast %48 : vector<8x1x16xf32> to vector<8x16xf32>
      %50 = vector.broadcast %47 : vector<8x1xf32> to vector<8x16xf32>
      %51 = arith.mulf %49, %50 : vector<8x16xf32>
      %c0_38 = arith.constant 0 : index
      %c0_39 = arith.constant 0 : index
      %52 = vector.load %arg7[%c0_38, %c0_39] : memref<8x16xf32, #tpu.memory_space<vmem>>, vector<8x16xf32>
      tpu.vector_store %arg7[%c0_38, %c0_39], %51 {strides = array<i32>} : memref<8x16xf32, #tpu.memory_space<vmem>>, vector<8x16xf32>,
    } else {
    }
    return
  }
  func.func @transform_0(%arg0: i32, %arg1: i32) -> (i32, i32) {
    %c0_i32 = arith.constant 0 : i32
    %c0_i32_0 = arith.constant 0 : i32
    return %arg0, %c0_i32 : i32, i32
  }
  func.func @transform_1(%arg0: i32, %arg1: i32) -> (i32, i32, i32) {
    %c0_i32 = arith.constant 0 : i32
    %c0_i32_0 = arith.constant 0 : i32
    return %arg0, %arg1, %c0_i32 : i32, i32, i32
  }
  func.func @transform_2(%arg0: i32, %arg1: i32) -> (i32, i32, i32) {
    %c0_i32 = arith.constant 0 : i32
    %c0_i32_0 = arith.constant 0 : i32
    return %arg0, %arg1, %c0_i32 : i32, i32, i32
  }
  func.func @transform_3(%arg0: i32, %arg1: i32) -> (i32, i32) {
    %c0_i32 = arith.constant 0 : i32
    return %arg0, %arg1 : i32, i32
  }
  func.func @transform_4(%arg0: i32, %arg1: i32) -> (i32, i32) {
    %c0_i32 = arith.constant 0 : i32
    %c0_i32_0 = arith.constant 0 : i32
    %c0_i32_1 = arith.constant 0 : i32
    return %c0_i32, %c0_i32_0 : i32, i32
  }
  func.func @transform_5(%arg0: i32, %arg1: i32) -> (i32, i32) {
    %c0_i32 = arith.constant 0 : i32
    %c0_i32_0 = arith.constant 0 : i32
    return %arg0, %c0_i32 : i32, i32
  }
}

</mosaic_0001>

<llo_original>
// kernel: tpu_custom_call.1
$region0: #{tpu_custom_call.1}
  #allocation0 [shape = 'u32[]', space=smem, size = 0x4, offset = 0x4, fixed_abs, tag = 'smem constant byte address 0x4 - core index']
  #allocation1 [shape = 'u32[144,128]{1,0:T(1,128)}', space=vmem, size = 0x12000, scoped, tag = 'internal scratch']
  #allocation2 [shape = 'f32[8,1]{1,0:T(8,128)}', space=vmem, size = 0x1000, scoped, tag = 'scratch operand']
  #allocation3 [shape = 'f32[8,1]{1,0:T(8,128)}', space=vmem, size = 0x1000, scoped, tag = 'scratch operand']
  #allocation4 [shape = 'f32[8,1,16]{2,1,0:T(1,128)}', space=vmem, size = 0x1000, scoped, tag = 'scratch operand']
  %s0 = inlined_call_operand.hbm [shape: f32[8,32], index: 0, kind: input, shape index: {}]
  %s1 = inlined_call_operand.hbm [shape: f32[8,8,32], index: 1, kind: input, shape index: {}]
  %s2 = inlined_call_operand.hbm [shape: f32[8,8,16], index: 2, kind: input, shape index: {}]
  %s3 = inlined_call_operand.vmem [shape: f32[8,8], index: 3, kind: input, shape index: {}]
  %s4 = inlined_call_operand.vmem [shape: f32[1,32], index: 4, kind: input, shape index: {}]
  %s5 = inlined_call_operand.hbm [shape: f32[8,16], index: 5, kind: output, shape index: {}]
  %s6 = sld [smem:[#allocation0]]
  $region50: #{tpu_custom_call.1} parent=0
    _
  %s8 = ssub.s32 1, %s6
  %s9 = scalar_select 0, %s8, %s6
  $region1: #{tpu_custom_call.1} parent=0
    #allocation5 [shape = 'u8[4096]{0}', space=vmem, size = 0x1000, scoped, tag = 'input window, operand 0, single buffered']
    #allocation6 [shape = 's32[1]{0}', space=sflag, size = 0x4, scoped, tag = 'scoped memory for tpu_custom_call.1']
    #allocation7 [shape = 's32[1]{0}', space=sflag, size = 0x4, scoped, tag = 'scoped memory for tpu_custom_call.1']
    #allocation8 [shape = 'u8[32768]{0}', space=vmem, size = 0x8000, scoped, tag = 'input window, operand 1, single buffered']
    #allocation9 [shape = 's32[1]{0}', space=sflag, size = 0x4, scoped, tag = 'scoped memory for tpu_custom_call.1']
    #allocation10 [shape = 'u8[32768]{0}', space=vmem, size = 0x8000, scoped, tag = 'input window, operand 2, single buffered']
    #allocation11 [shape = 'u8[4096]{0}', space=vmem, size = 0x1000, scoped, tag = 'output window, operand 0, single buffered']
    %10 = vsyncpa [#allocation6], 0
    %11 = vsyncpa [#allocation9], 0
    %12 = vsyncpa [#allocation7], 0
    // Predicated region
    $region2: #{tpu_custom_call.1} parent=1 // pred_check
      _
    $region3: #{tpu_custom_call.1} parent=1 // pred_check_branch
      %14 = sbr.rel (0) target = $region5
    $region4: #{tpu_custom_call.1} parent=1 // pred_region
      %s16 = ssub.s32 128, 128
      %17 = vsyncadd [#allocation6], %s16
      %s19 = sshll.u32 [#allocation5], 4
      %s20 = int_to_ptr.vmem [resolvable:$true] %s19
      %22 = dma.hbm_to_vmem [thread:$0]  %s0, 128, %s20, [#allocation6]
    $region5: #{tpu_custom_call.1} parent=1 // pred_fallthru
      _
    // Predicated region
    $region6: #{tpu_custom_call.1} parent=1 // pred_check
      _
    $region7: #{tpu_custom_call.1} parent=1 // pred_check_branch
      %24 = sbr.rel (0) target = $region9
    $region8: #{tpu_custom_call.1} parent=1 // pred_region
      %s26 = ssub.s32 1024, 1024
      %27 = vsyncadd [#allocation9], %s26
      %s28 = sshll.u32 [#allocation8], 4
      %s29 = int_to_ptr.vmem [resolvable:$true] %s28
      %34 = dma.hbm_to_vmem [thread:$0]  %s1, 1024, %s29, [#allocation9], 128, 128, 8
    $region9: #{tpu_custom_call.1} parent=1 // pred_fallthru
      _
    // Predicated region
    $region10: #{tpu_custom_call.1} parent=1 // pred_check
      _
    $region11: #{tpu_custom_call.1} parent=1 // pred_check_branch
      %36 = sbr.rel (0) target = $region13
    $region12: #{tpu_custom_call.1} parent=1 // pred_region
      %s38 = ssub.s32 1024, 1024
      %39 = vsyncadd [#allocation9], %s38
      %s40 = sshll.u32 [#allocation10], 4
      %s41 = int_to_ptr.vmem [resolvable:$true] %s40
      %46 = dma.hbm_to_vmem [thread:$0]  %s2, 1024, %s41, [#allocation9], 128, 128, 8
    $region13: #{tpu_custom_call.1} parent=1 // pred_fallthru
      _
    // Predicated region
    $region14: #{tpu_custom_call.1} parent=1 // pred_check
      _
    $region15: #{tpu_custom_call.1} parent=1 // pred_check_branch
      %48 = sbr.rel (0) target = $region17
    $region16: #{tpu_custom_call.1} parent=1 // pred_region
      _
    $region17: #{tpu_custom_call.1} parent=1 // pred_fallthru
      _
    // Predicated region
    $region18: #{tpu_custom_call.1} parent=1 // pred_check
      _
    $region19: #{tpu_custom_call.1} parent=1 // pred_check_branch
      %50 = sbr.rel (0) target = $region21
    $region20: #{tpu_custom_call.1} parent=1 // pred_region
      _
    $region21: #{tpu_custom_call.1} parent=1 // pred_fallthru
      _
    // Predicated region
    $region22: #{tpu_custom_call.1} parent=1 // pred_check
      _
    $region23: #{tpu_custom_call.1} parent=1 // pred_check_branch
      %52 = sbr.rel (0) target = $region25
    $region24: #{tpu_custom_call.1} parent=1 // pred_region
      %53 = dma.done [#allocation6], 128
    $region25: #{tpu_custom_call.1} parent=1 // pred_fallthru
      _
    // Predicated region
    $region26: #{tpu_custom_call.1} parent=1 // pred_check
      _
    $region27: #{tpu_custom_call.1} parent=1 // pred_check_branch
      %55 = sbr.rel (0) target = $region29
    $region28: #{tpu_custom_call.1} parent=1 // pred_region
      %56 = dma.done [#allocation9], 1024
    $region29: #{tpu_custom_call.1} parent=1 // pred_fallthru
      _
    // Predicated region
    $region30: #{tpu_custom_call.1} parent=1 // pred_check
      _
    $region31: #{tpu_custom_call.1} parent=1 // pred_check_branch
      %58 = sbr.rel (0) target = $region33
    $region32: #{tpu_custom_call.1} parent=1 // pred_region
      %59 = dma.done [#allocation9], 1024
    $region33: #{tpu_custom_call.1} parent=1 // pred_fallthru
      _
    %p60 = scmp.eq.s32.totalorder 0, 0
    // Predicated region
    $region34: #{tpu_custom_call.1} parent=1 // pred_check
      %p61 = pneg %p60
    $region35: #{tpu_custom_call.1} parent=1 // pred_check_branch
      %63 = sbr.rel (%p61) target = $region37
    $region36: #{tpu_custom_call.1} parent=1 // pred_region
      %vm64 = vcmask 7168
      %65 = vst.msk [vmem:[#allocation2] sm:$0xff] %vm64, -1e+30
      %66 = vst.msk [vmem:[#allocation3] sm:$0xff] %vm64, 0.0
      %vm67 = vcmask 122880
      %68 = vst.msk [vmem:[#allocation4] sm:$0x1] %vm67, 0.0
      %69 = vst.msk [vmem:[#allocation4 + $0x1] sm:$0x1] %vm67, 0.0
      %70 = vst.msk [vmem:[#allocation4 + $0x2] sm:$0x1] %vm67, 0.0
      %71 = vst.msk [vmem:[#allocation4 + $0x3] sm:$0x1] %vm67, 0.0
      %72 = vst.msk [vmem:[#allocation4 + $0x4] sm:$0x1] %vm67, 0.0
      %73 = vst.msk [vmem:[#allocation4 + $0x5] sm:$0x1] %vm67, 0.0
      %74 = vst.msk [vmem:[#allocation4 + $0x6] sm:$0x1] %vm67, 0.0
      %75 = vst.msk [vmem:[#allocation4 + $0x7] sm:$0x1] %vm67, 0.0
    $region37: #{tpu_custom_call.1} parent=1 // pred_fallthru
      _
    %v76 = vld [vmem:[#allocation5] sm:$0xff]
    %v78 = vcombine.high %v76, %v76
    %v80 = vunpack.c.l.s4 1966171168
    %v81 = vunpack.c.0.s8 %v80
    %v82 = vlaneseq
    %v83 = vshrl.u32 %v82, 7
    %v84 = vsub.s32 %v81, %v83
    %v85 = vrot.slane %v76, %v84
    %v87 = vunpack.c.l.s4 1966171168
    %v88 = vunpack.c.0.s8 %v87
    %v89 = vlaneseq
    %v90 = vshrl.u32 %v89, 7
    %v91 = vsub.s32 %v88, %v90
    %v92 = vrot.slane %v78, %v91
    %v93 = vcombine.high %v85, %v85
    %v94 = vcombine.high %v92, %v92
    %v96 = vunpack.c.l.s4 1966171168
    %v97 = vunpack.c.0.s8 %v96
    %v98 = vlaneseq
    %v99 = vshrl.u32 %v98, 7
    %v100 = vsub.s32 %v97, %v99
    %v101 = vrot.slane %v85, %v100
    %v103 = vunpack.c.l.s4 1966171168
    %v104 = vunpack.c.0.s8 %v103
    %v105 = vlaneseq
    %v106 = vshrl.u32 %v105, 7
    %v107 = vsub.s32 %v104, %v106
    %v108 = vrot.slane %v92, %v107
    %v110 = vunpack.c.l.s4 1966171168
    %v111 = vunpack.c.0.s8 %v110
    %v112 = vlaneseq
    %v113 = vshrl.u32 %v112, 7
    %v114 = vsub.s32 %v111, %v113
    %v115 = vrot.slane %v93, %v114
    %v117 = vunpack.c.l.s4 1966171168
    %v118 = vunpack.c.0.s8 %v117
    %v119 = vlaneseq
    %v120 = vshrl.u32 %v119, 7
    %v121 = vsub.s32 %v118, %v120
    %v122 = vrot.slane %v94, %v121
    %v123 = vcombine.high %v101, %v101
    %v124 = vcombine.high %v108, %v108
    %v125 = vcombine.high %v115, %v115
    %v126 = vcombine.high %v122, %v122
    %v127 = vld [vmem:[#allocation8] sm:$0xff]
    %v128 = vld [vmem:[#allocation8 + $0x8] sm:$0xff]
    %v129 = vld [vmem:[#allocation8 + $0x10] sm:$0xff]
    %v130 = vld [vmem:[#allocation8 + $0x18] sm:$0xff]
    %v131 = vld [vmem:[#allocation8 + $0x20] sm:$0xff]
    %v132 = vld [vmem:[#allocation8 + $0x28] sm:$0xff]
    %v133 = vld [vmem:[#allocation8 + $0x30] sm:$0xff]
    %v134 = vld [vmem:[#allocation8 + $0x38] sm:$0xff]
    %v135 = vlaneseq
    %v136 = vshrl.u32 %v135, 7
    %v137 = vsub.s32 0, %v136
    %v138 = vrot.slane %v101, %v137
    %v139 = vlaneseq
    %v140 = vshrl.u32 %v139, 7
    %v141 = vsub.s32 0, %v140
    %v142 = vrot.slane %v115, %v141
    %v143 = vlaneseq
    %v144 = vshrl.u32 %v143, 7
    %v145 = vsub.s32 0, %v144
    %v146 = vrot.slane %v123, %v145
    %v147 = vlaneseq
    %v148 = vshrl.u32 %v147, 7
    %v149 = vsub.s32 0, %v148
    %v150 = vrot.slane %v125, %v149
    %v151 = vlaneseq
    %v152 = vshrl.u32 %v151, 7
    %v153 = vsub.s32 0, %v152
    %v154 = vrot.slane %v108, %v153
    %v155 = vlaneseq
    %v156 = vshrl.u32 %v155, 7
    %v157 = vsub.s32 0, %v156
    %v158 = vrot.slane %v122, %v157
    %v159 = vlaneseq
    %v160 = vshrl.u32 %v159, 7
    %v161 = vsub.s32 0, %v160
    %v162 = vrot.slane %v124, %v161
    %v163 = vlaneseq
    %v164 = vshrl.u32 %v163, 7
    %v165 = vsub.s32 0, %v164
    %v166 = vrot.slane %v126, %v165
    %v175 = vadd.f32 %v138, %v127
    %v176 = vadd.f32 %v142, %v128
    %v177 = vadd.f32 %v146, %v129
    %v178 = vadd.f32 %v150, %v130
    %v179 = vadd.f32 %v154, %v131
    %v180 = vadd.f32 %v158, %v132
    %v181 = vadd.f32 %v162, %v133
    %v182 = vadd.f32 %v166, %v134
    %v183 = vmax.f32 %v175, 0.0
    %v184 = vmax.f32 %v176, 0.0
    %v185 = vmax.f32 %v177, 0.0
    %v186 = vmax.f32 %v178, 0.0
    %v187 = vmax.f32 %v179, 0.0
    %v188 = vmax.f32 %v180, 0.0
    %v189 = vmax.f32 %v181, 0.0
    %v190 = vmax.f32 %v182, 0.0
    %v191 = vld [vmem:[%s4] sm:$0x1]
    %v193 = vlaneseq
    %v194 = vshrl.u32 %v193, 7
    %v195 = vsub.s32 0, %v194
    %v196 = vrot.slane %v191, %v195
    %v198 = vmul.f32 %v183, %v196
    %v199 = vmul.f32 %v184, %v196
    %v200 = vmul.f32 %v185, %v196
    %v201 = vmul.f32 %v186, %v196
    %v202 = vmul.f32 %v187, %v196
    %v203 = vmul.f32 %v188, %v196
    %v204 = vmul.f32 %v189, %v196
    %v205 = vmul.f32 %v190, %v196
    %vm206 = vcmask 261120
    %v207 = vsel %vm206, %v198, 0.0
    %208 = vadd.xlane.f32.xlu0 %v207
    %v209 = vpop.xlane.xlu0 %208
    %v210 = vsel %vm206, %v199, 0.0
    %211 = vadd.xlane.f32.xlu0 %v210
    %v212 = vpop.xlane.xlu0 %211
    %v213 = vsel %vm206, %v200, 0.0
    %214 = vadd.xlane.f32.xlu0 %v213
    %v215 = vpop.xlane.xlu0 %214
    %v216 = vsel %vm206, %v201, 0.0
    %217 = vadd.xlane.f32.xlu0 %v216
    %v218 = vpop.xlane.xlu0 %217
    %v219 = vsel %vm206, %v202, 0.0
    %220 = vadd.xlane.f32.xlu0 %v219
    %v221 = vpop.xlane.xlu0 %220
    %v222 = vsel %vm206, %v203, 0.0
    %223 = vadd.xlane.f32.xlu0 %v222
    %v224 = vpop.xlane.xlu0 %223
    %v225 = vsel %vm206, %v204, 0.0
    %226 = vadd.xlane.f32.xlu0 %v225
    %v227 = vpop.xlane.xlu0 %226
    %v228 = vsel %vm206, %v205, 0.0
    %229 = vadd.xlane.f32.xlu0 %v228
    %v230 = vpop.xlane.xlu0 %229
    %v231 = vld [vmem:[%s3] sm:$0xff]
    %v233 = vlaneseq
    %v234 = vshrl.u32 %v233, 7
    %v235 = vsub.s32 0, %v234
    %v236 = vrot.slane %v231, %v235
    %238 = vbcast.lane.b32.xlu0 %v236, 256
    %v239 = vpop.permute.xlu0 %238
    %v240 = vlaneseq
    %v241 = vshrl.u32 %v240, 7
    %v242 = vsub.s32 1, %v241
    %v243 = vrot.slane %v231, %v242
    %245 = vbcast.lane.b32.xlu0 %v243, 256
    %v246 = vpop.permute.xlu0 %245
    %v247 = vlaneseq
    %v248 = vshrl.u32 %v247, 7
    %v249 = vsub.s32 2, %v248
    %v250 = vrot.slane %v231, %v249
    %252 = vbcast.lane.b32.xlu0 %v250, 256
    %v253 = vpop.permute.xlu0 %252
    %v254 = vlaneseq
    %v255 = vshrl.u32 %v254, 7
    %v256 = vsub.s32 3, %v255
    %v257 = vrot.slane %v231, %v256
    %259 = vbcast.lane.b32.xlu0 %v257, 256
    %v260 = vpop.permute.xlu0 %259
    %v261 = vlaneseq
    %v262 = vshrl.u32 %v261, 7
    %v263 = vsub.s32 4, %v262
    %v264 = vrot.slane %v231, %v263
    %266 = vbcast.lane.b32.xlu0 %v264, 256
    %v267 = vpop.permute.xlu0 %266
    %v268 = vlaneseq
    %v269 = vshrl.u32 %v268, 7
    %v270 = vsub.s32 5, %v269
    %v271 = vrot.slane %v231, %v270
    %273 = vbcast.lane.b32.xlu0 %v271, 256
    %v274 = vpop.permute.xlu0 %273
    %v275 = vlaneseq
    %v276 = vshrl.u32 %v275, 7
    %v277 = vsub.s32 6, %v276
    %v278 = vrot.slane %v231, %v277
    %280 = vbcast.lane.b32.xlu0 %v278, 256
    %v281 = vpop.permute.xlu0 %280
    %v282 = vlaneseq
    %v283 = vshrl.u32 %v282, 7
    %v284 = vsub.s32 7, %v283
    %v285 = vrot.slane %v231, %v284
    %287 = vbcast.lane.b32.xlu0 %v285, 256
    %v288 = vpop.permute.xlu0 %287
    %v297 = vadd.f32 %v209, %v239
    %v298 = vadd.f32 %v212, %v246
    %v299 = vadd.f32 %v215, %v253
    %v300 = vadd.f32 %v218, %v260
    %v301 = vadd.f32 %v221, %v267
    %v302 = vadd.f32 %v224, %v274
    %v303 = vadd.f32 %v227, %v281
    %v304 = vadd.f32 %v230, %v288
    %v305 = vld [vmem:[#allocation2] sm:$0xff]
    %314 = vset.pattern.permute.xlu0 0
    %315 = vperm.xlu0 %314, %v297
    %v316 = vpop.permute.xlu0 %315
    %317 = vset.pattern.permute.xlu0 0
    %318 = vperm.xlu0 %317, %v298
    %v319 = vpop.permute.xlu0 %318
    %320 = vset.pattern.permute.xlu0 0
    %321 = vperm.xlu0 %320, %v299
    %v322 = vpop.permute.xlu0 %321
    %323 = vset.pattern.permute.xlu0 0
    %324 = vperm.xlu0 %323, %v300
    %v325 = vpop.permute.xlu0 %324
    %326 = vset.pattern.permute.xlu0 0
    %327 = vperm.xlu0 %326, %v301
    %v328 = vpop.permute.xlu0 %327
    %329 = vset.pattern.permute.xlu0 0
    %330 = vperm.xlu0 %329, %v302
    %v331 = vpop.permute.xlu0 %330
    %332 = vset.pattern.permute.xlu0 0
    %333 = vperm.xlu0 %332, %v303
    %v334 = vpop.permute.xlu0 %333
    %335 = vset.pattern.permute.xlu0 0
    %336 = vperm.xlu0 %335, %v304
    %v337 = vpop.permute.xlu0 %336
    %v338 = vlaneseq
    %v339 = vand.u32 %v338, 127
    %v340 = vlaneseq
    %v341 = vshrl.u32 %v340, 7
    %v342 = vsub.s32 %v339, %v341
    %v343 = vrot.slane %v316, %v342
    %v344 = vlaneseq
    %v345 = vshrl.u32 %v344, 7
    %v346 = vsub.s32 %v339, %v345
    %v347 = vrot.slane %v319, %v346
    %v348 = vlaneseq
    %v349 = vshrl.u32 %v348, 7
    %v350 = vsub.s32 %v339, %v349
    %v351 = vrot.slane %v322, %v350
    %v352 = vlaneseq
    %v353 = vshrl.u32 %v352, 7
    %v354 = vsub.s32 %v339, %v353
    %v355 = vrot.slane %v325, %v354
    %v356 = vlaneseq
    %v357 = vshrl.u32 %v356, 7
    %v358 = vsub.s32 %v339, %v357
    %v359 = vrot.slane %v328, %v358
    %v360 = vlaneseq
    %v361 = vshrl.u32 %v360, 7
    %v362 = vsub.s32 %v339, %v361
    %v363 = vrot.slane %v331, %v362
    %v364 = vlaneseq
    %v365 = vshrl.u32 %v364, 7
    %v366 = vsub.s32 %v339, %v365
    %v367 = vrot.slane %v334, %v366
    %v368 = vlaneseq
    %v369 = vshrl.u32 %v368, 7
    %v370 = vsub.s32 %v339, %v369
    %v371 = vrot.slane %v337, %v370
    %vm372 = vcmask 1041409
    %v373 = vsel %vm372, %v347, %v343
    %vm374 = vcmask 1042434
    %v375 = vsel %vm374, %v351, %v373
    %vm376 = vcmask 1043459
    %v377 = vsel %vm376, %v355, %v375
    %vm378 = vcmask 1044484
    %v379 = vsel %vm378, %v359, %v377
    %vm380 = vcmask 1045509
    %v381 = vsel %vm380, %v363, %v379
    %vm382 = vcmask 1046534
    %v383 = vsel %vm382, %v367, %v381
    %vm384 = vcmask 1047559
    %v385 = vsel %vm384, %v371, %v383
    %vm387 = vcmask 64512
    %v388 = vsel %vm387, %v385, -inf
    %389 = vmax.xlane.f32.xlu0 %v388
    %v390 = vpop.xlane.xlu0 %389
    %v391 = vmax.f32 %v305, %v390
    %v392 = vsub.f32 %v305, %v391
    %v393 = vmul.f32 %v392, 1.442695
    %v394 = vpow.pop %v393
    %396 = vset.pattern.permute.xlu0 0
    %397 = vperm.xlu0 %396, %v391
    %v398 = vpop.permute.xlu0 %397
    %v399 = vlaneseq
    %v400 = vshrl.u32 %v399, 7
    %v401 = vsub.s32 0, %v400
    %v402 = vrot.slane %v398, %v401
    %v403 = vlaneseq
    %v404 = vshrl.u32 %v403, 7
    %v405 = vsub.s32 1, %v404
    %v406 = vrot.slane %v398, %v405
    %v407 = vlaneseq
    %v408 = vshrl.u32 %v407, 7
    %v409 = vsub.s32 2, %v408
    %v410 = vrot.slane %v398, %v409
    %v411 = vlaneseq
    %v412 = vshrl.u32 %v411, 7
    %v413 = vsub.s32 3, %v412
    %v414 = vrot.slane %v398, %v413
    %v415 = vlaneseq
    %v416 = vshrl.u32 %v415, 7
    %v417 = vsub.s32 4, %v416
    %v418 = vrot.slane %v398, %v417
    %v419 = vlaneseq
    %v420 = vshrl.u32 %v419, 7
    %v421 = vsub.s32 5, %v420
    %v422 = vrot.slane %v398, %v421
    %v423 = vlaneseq
    %v424 = vshrl.u32 %v423, 7
    %v425 = vsub.s32 6, %v424
    %v426 = vrot.slane %v398, %v425
    %v427 = vlaneseq
    %v428 = vshrl.u32 %v427, 7
    %v429 = vsub.s32 7, %v428
    %v430 = vrot.slane %v398, %v429
    %v439 = vsub.f32 %v297, %v402
    %v440 = vsub.f32 %v298, %v406
    %v441 = vsub.f32 %v299, %v410
    %v442 = vsub.f32 %v300, %v414
    %v443 = vsub.f32 %v301, %v418
    %v444 = vsub.f32 %v302, %v422
    %v445 = vsub.f32 %v303, %v426
    %v446 = vsub.f32 %v304, %v430
    %v447 = vmul.f32 %v439, 1.442695
    %v448 = vpow.pop %v447
    %v449 = vmul.f32 %v440, 1.442695
    %v450 = vpow.pop %v449
    %v451 = vmul.f32 %v441, 1.442695
    %v452 = vpow.pop %v451
    %v453 = vmul.f32 %v442, 1.442695
    %v454 = vpow.pop %v453
    %v455 = vmul.f32 %v443, 1.442695
    %v456 = vpow.pop %v455
    %v457 = vmul.f32 %v444, 1.442695
    %v458 = vpow.pop %v457
    %v459 = vmul.f32 %v445, 1.442695
    %v460 = vpow.pop %v459
    %v461 = vmul.f32 %v446, 1.442695
    %v462 = vpow.pop %v461
    %v463 = vld [vmem:[#allocation3] sm:$0xff]
    %v464 = vmul.f32 %v394, %v463
    %473 = vset.pattern.permute.xlu0 0
    %474 = vperm.xlu0 %473, %v448
    %v475 = vpop.permute.xlu0 %474
    %476 = vset.pattern.permute.xlu0 0
    %477 = vperm.xlu0 %476, %v450
    %v478 = vpop.permute.xlu0 %477
    %479 = vset.pattern.permute.xlu0 0
    %480 = vperm.xlu0 %479, %v452
    %v481 = vpop.permute.xlu0 %480
    %482 = vset.pattern.permute.xlu0 0
    %483 = vperm.xlu0 %482, %v454
    %v484 = vpop.permute.xlu0 %483
    %485 = vset.pattern.permute.xlu0 0
    %486 = vperm.xlu0 %485, %v456
    %v487 = vpop.permute.xlu0 %486
    %488 = vset.pattern.permute.xlu0 0
    %489 = vperm.xlu0 %488, %v458
    %v490 = vpop.permute.xlu0 %489
    %491 = vset.pattern.permute.xlu0 0
    %492 = vperm.xlu0 %491, %v460
    %v493 = vpop.permute.xlu0 %492
    %494 = vset.pattern.permute.xlu0 0
    %495 = vperm.xlu0 %494, %v462
    %v496 = vpop.permute.xlu0 %495
    %v497 = vlaneseq
    %v498 = vshrl.u32 %v497, 7
    %v499 = vsub.s32 %v339, %v498
    %v500 = vrot.slane %v475, %v499
    %v501 = vlaneseq
    %v502 = vshrl.u32 %v501, 7
    %v503 = vsub.s32 %v339, %v502
    %v504 = vrot.slane %v478, %v503
    %v505 = vlaneseq
    %v506 = vshrl.u32 %v505, 7
    %v507 = vsub.s32 %v339, %v506
    %v508 = vrot.slane %v481, %v507
    %v509 = vlaneseq
    %v510 = vshrl.u32 %v509, 7
    %v511 = vsub.s32 %v339, %v510
    %v512 = vrot.slane %v484, %v511
    %v513 = vlaneseq
    %v514 = vshrl.u32 %v513, 7
    %v515 = vsub.s32 %v339, %v514
    %v516 = vrot.slane %v487, %v515
    %v517 = vlaneseq
    %v518 = vshrl.u32 %v517, 7
    %v519 = vsub.s32 %v339, %v518
    %v520 = vrot.slane %v490, %v519
    %v521 = vlaneseq
    %v522 = vshrl.u32 %v521, 7
    %v523 = vsub.s32 %v339, %v522
    %v524 = vrot.slane %v493, %v523
    %v525 = vlaneseq
    %v526 = vshrl.u32 %v525, 7
    %v527 = vsub.s32 %v339, %v526
    %v528 = vrot.slane %v496, %v527
    %v529 = vsel %vm372, %v504, %v500
    %v530 = vsel %vm374, %v508, %v529
    %v531 = vsel %vm376, %v512, %v530
    %v532 = vsel %vm378, %v516, %v531
    %v533 = vsel %vm380, %v520, %v532
    %v534 = vsel %vm382, %v524, %v533
    %v535 = vsel %vm384, %v528, %v534
    %v537 = vsel %vm387, %v535, 0.0
    %538 = vadd.xlane.f32.xlu0 %v537
    %v539 = vpop.xlane.xlu0 %538
    %v540 = vadd.f32 %v464, %v539
    %vm541 = vcmask 7168
    %542 = vst.msk [vmem:[#allocation3] sm:$0xff] %vm541, %v540
    %v543 = vld [vmem:[#allocation10] sm:$0xff]
    %v544 = vld [vmem:[#allocation10 + $0x8] sm:$0xff]
    %v545 = vld [vmem:[#allocation10 + $0x10] sm:$0xff]
    %v546 = vld [vmem:[#allocation10 + $0x18] sm:$0xff]
    %v547 = vld [vmem:[#allocation10 + $0x20] sm:$0xff]
    %v548 = vld [vmem:[#allocation10 + $0x28] sm:$0xff]
    %v549 = vld [vmem:[#allocation10 + $0x30] sm:$0xff]
    %v550 = vld [vmem:[#allocation10 + $0x38] sm:$0xff]
    %v551 = vsel %vm387, %v500, 0
    %553 = vmatprep.subr.mxu0 0.0
    %554 = vmatpush1.msra.mxu0 %v543
    %555 = vmatprep.subr.mxu0 0.0
    %556 = vmatpush1.msra.mxu0 0.0
    %557 = vmatprep.subr.mxu0 0.0
    %558 = vmatpush1.msra.mxu0 0.0
    %559 = vmatprep.subr.mxu0 0.0
    %560 = vmatpush1.msra.mxu0 0.0
    %561 = vmatprep.subr.mxu0 0.0
    %562 = vmatpush1.msra.mxu0 0.0
    %563 = vmatprep.subr.mxu0 0.0
    %564 = vmatpush1.msra.mxu0 0.0
    %565 = vmatprep.subr.mxu0 0.0
    %566 = vmatpush1.msra.mxu0 0.0
    %567 = vmatprep.subr.mxu0 0.0
    %568 = vmatpush1.msra.mxu0 0.0
    %569 = vmatprep.subr.mxu0 0.0
    %570 = vmatpush1.msra.mxu0 0.0
    %571 = vmatprep.subr.mxu0 0.0
    %572 = vmatpush1.msra.mxu0 0.0
    %573 = vmatprep.subr.mxu0 0.0
    %574 = vmatpush1.msra.mxu0 0.0
    %575 = vmatprep.subr.mxu0 0.0
    %576 = vmatpush1.msra.mxu0 0.0
    %577 = vmatprep.subr.mxu0 0.0
    %578 = vmatpush1.msra.mxu0 0.0
    %579 = vmatprep.subr.mxu0 0.0
    %580 = vmatpush1.msra.mxu0 0.0
    %581 = vmatprep.subr.mxu0 0.0
    %582 = vmatpush1.msra.mxu0 0.0
    %583 = vmatprep.subr.mxu0 0.0
    %584 = vmatpush1.msra.mxu0 0.0
    %585 = vmatprep.subr.mxu0 0.0
    %586 = vmatpush1.msra.mxu0 0.0
    %587 = vmatprep.subr.mxu0 0.0
    %588 = vmatpush1.msra.mxu0 0.0
    %589 = vmatprep.subr.mxu0 0.0
    %590 = vmatpush1.msra.mxu0 0.0
    %591 = vmatprep.subr.mxu0 0.0
    %592 = vmatpush1.msra.mxu0 0.0
    %593 = vmatprep.subr.mxu0 0.0
    %594 = vmatpush1.msra.mxu0 0.0
    %595 = vmatprep.subr.mxu0 0.0
    %596 = vmatpush1.msra.mxu0 0.0
    %597 = vmatprep.subr.mxu0 0.0
    %598 = vmatpush1.msra.mxu0 0.0
    %599 = vmatprep.subr.mxu0 0.0
    %600 = vmatpush1.msra.mxu0 0.0
    %601 = vmatprep.subr.mxu0 0.0
    %602 = vmatpush1.msra.mxu0 0.0
    %603 = vmatprep.subr.mxu0 0.0
    %604 = vmatpush1.msra.mxu0 0.0
    %605 = vmatprep.subr.mxu0 0.0
    %606 = vmatpush1.msra.mxu0 0.0
    %607 = vmatprep.subr.mxu0 0.0
    %608 = vmatpush1.msra.mxu0 0.0
    %609 = vmatprep.subr.mxu0 0.0
    %610 = vmatpush1.msra.mxu0 0.0
    %611 = vmatprep.subr.mxu0 0.0
    %612 = vmatpush1.msra.mxu0 0.0
    %613 = vmatprep.subr.mxu0 0.0
    %614 = vmatpush1.msra.mxu0 0.0
    %615 = vmatprep.subr.mxu0 0.0
    %616 = vmatpush1.msra.mxu0 0.0
    %617 = vmatprep.mubr.f32.mxu0 0.0
    %618 = vmatmul.mubr.f32.gmra.mrb[0].mxu0 %v551
    %v619 = vpop.f32.mrb[0].mxu0
    %v620 = vadd.f32 0.0, %v619
    %v621 = vpop.f32.mrb[0].mxu0
    %622 = vdwg.mxu0
    %v623 = vsel %vm387, %v504, 0
    %625 = vmatprep.subr.mxu0 0.0
    %626 = vmatpush1.msra.mxu0 %v544
    %627 = vmatprep.subr.mxu0 0.0
    %628 = vmatpush1.msra.mxu0 0.0
    %629 = vmatprep.subr.mxu0 0.0
    %630 = vmatpush1.msra.mxu0 0.0
    %631 = vmatprep.subr.mxu0 0.0
    %632 = vmatpush1.msra.mxu0 0.0
    %633 = vmatprep.subr.mxu0 0.0
    %634 = vmatpush1.msra.mxu0 0.0
    %635 = vmatprep.subr.mxu0 0.0
    %636 = vmatpush1.msra.mxu0 0.0
    %637 = vmatprep.subr.mxu0 0.0
    %638 = vmatpush1.msra.mxu0 0.0
    %639 = vmatprep.subr.mxu0 0.0
    %640 = vmatpush1.msra.mxu0 0.0
    %641 = vmatprep.subr.mxu0 0.0
    %642 = vmatpush1.msra.mxu0 0.0
    %643 = vmatprep.subr.mxu0 0.0
    %644 = vmatpush1.msra.mxu0 0.0
    %645 = vmatprep.subr.mxu0 0.0
    %646 = vmatpush1.msra.mxu0 0.0
    %647 = vmatprep.subr.mxu0 0.0
    %648 = vmatpush1.msra.mxu0 0.0
    %649 = vmatprep.subr.mxu0 0.0
    %650 = vmatpush1.msra.mxu0 0.0
    %651 = vmatprep.subr.mxu0 0.0
    %652 = vmatpush1.msra.mxu0 0.0
    %653 = vmatprep.subr.mxu0 0.0
    %654 = vmatpush1.msra.mxu0 0.0
    %655 = vmatprep.subr.mxu0 0.0
    %656 = vmatpush1.msra.mxu0 0.0
    %657 = vmatprep.subr.mxu0 0.0
    %658 = vmatpush1.msra.mxu0 0.0
    %659 = vmatprep.subr.mxu0 0.0
    %660 = vmatpush1.msra.mxu0 0.0
    %661 = vmatprep.subr.mxu0 0.0
    %662 = vmatpush1.msra.mxu0 0.0
    %663 = vmatprep.subr.mxu0 0.0
    %664 = vmatpush1.msra.mxu0 0.0
    %665 = vmatprep.subr.mxu0 0.0
    %666 = vmatpush1.msra.mxu0 0.0
    %667 = vmatprep.subr.mxu0 0.0
    %668 = vmatpush1.msra.mxu0 0.0
    %669 = vmatprep.subr.mxu0 0.0
    %670 = vmatpush1.msra.mxu0 0.0
    %671 = vmatprep.subr.mxu0 0.0
    %672 = vmatpush1.msra.mxu0 0.0
    %673 = vmatprep.subr.mxu0 0.0
    %674 = vmatpush1.msra.mxu0 0.0
    %675 = vmatprep.subr.mxu0 0.0
    %676 = vmatpush1.msra.mxu0 0.0
    %677 = vmatprep.subr.mxu0 0.0
    %678 = vmatpush1.msra.mxu0 0.0
    %679 = vmatprep.subr.mxu0 0.0
    %680 = vmatpush1.msra.mxu0 0.0
    %681 = vmatprep.subr.mxu0 0.0
    %682 = vmatpush1.msra.mxu0 0.0
    %683 = vmatprep.subr.mxu0 0.0
    %684 = vmatpush1.msra.mxu0 0.0
    %685 = vmatprep.subr.mxu0 0.0
    %686 = vmatpush1.msra.mxu0 0.0
    %687 = vmatprep.subr.mxu0 0.0
    %688 = vmatpush1.msra.mxu0 0.0
    %689 = vmatprep.mubr.f32.mxu0 0.0
    %690 = vmatmul.mubr.f32.gmra.mrb[0].mxu0 %v623
    %v691 = vpop.f32.mrb[0].mxu0
    %v692 = vadd.f32 0.0, %v691
    %v693 = vpop.f32.mrb[0].mxu0
    %694 = vdwg.mxu0
    %v695 = vsel %vm387, %v508, 0
    %697 = vmatprep.subr.mxu0 0.0
    %698 = vmatpush1.msra.mxu0 %v545
    %699 = vmatprep.subr.mxu0 0.0
    %700 = vmatpush1.msra.mxu0 0.0
    %701 = vmatprep.subr.mxu0 0.0
    %702 = vmatpush1.msra.mxu0 0.0
    %703 = vmatprep.subr.mxu0 0.0
    %704 = vmatpush1.msra.mxu0 0.0
    %705 = vmatprep.subr.mxu0 0.0
    %706 = vmatpush1.msra.mxu0 0.0
    %707 = vmatprep.subr.mxu0 0.0
    %708 = vmatpush1.msra.mxu0 0.0
    %709 = vmatprep.subr.mxu0 0.0
    %710 = vmatpush1.msra.mxu0 0.0
    %711 = vmatprep.subr.mxu0 0.0
    %712 = vmatpush1.msra.mxu0 0.0
    %713 = vmatprep.subr.mxu0 0.0
    %714 = vmatpush1.msra.mxu0 0.0
    %715 = vmatprep.subr.mxu0 0.0
    %716 = vmatpush1.msra.mxu0 0.0
    %717 = vmatprep.subr.mxu0 0.0
    %718 = vmatpush1.msra.mxu0 0.0
    %719 = vmatprep.subr.mxu0 0.0
    %720 = vmatpush1.msra.mxu0 0.0
    %721 = vmatprep.subr.mxu0 0.0
    %722 = vmatpush1.msra.mxu0 0.0
    %723 = vmatprep.subr.mxu0 0.0
    %724 = vmatpush1.msra.mxu0 0.0
    %725 = vmatprep.subr.mxu0 0.0
    %726 = vmatpush1.msra.mxu0 0.0
    %727 = vmatprep.subr.mxu0 0.0
    %728 = vmatpush1.msra.mxu0 0.0
    %729 = vmatprep.subr.mxu0 0.0
    %730 = vmatpush1.msra.mxu0 0.0
    %731 = vmatprep.subr.mxu0 0.0
    %732 = vmatpush1.msra.mxu0 0.0
    %733 = vmatprep.subr.mxu0 0.0
    %734 = vmatpush1.msra.mxu0 0.0
    %735 = vmatprep.subr.mxu0 0.0
    %736 = vmatpush1.msra.mxu0 0.0
    %737 = vmatprep.subr.mxu0 0.0
    %738 = vmatpush1.msra.mxu0 0.0
    %739 = vmatprep.subr.mxu0 0.0
    %740 = vmatpush1.msra.mxu0 0.0
    %741 = vmatprep.subr.mxu0 0.0
    %742 = vmatpush1.msra.mxu0 0.0
    %743 = vmatprep.subr.mxu0 0.0
    %744 = vmatpush1.msra.mxu0 0.0
    %745 = vmatprep.subr.mxu0 0.0
    %746 = vmatpush1.msra.mxu0 0.0
    %747 = vmatprep.subr.mxu0 0.0
    %748 = vmatpush1.msra.mxu0 0.0
    %749 = vmatprep.subr.mxu0 0.0
    %750 = vmatpush1.msra.mxu0 0.0
    %751 = vmatprep.subr.mxu0 0.0
    %752 = vmatpush1.msra.mxu0 0.0
    %753 = vmatprep.subr.mxu0 0.0
    %754 = vmatpush1.msra.mxu0 0.0
    %755 = vmatprep.subr.mxu0 0.0
    %756 = vmatpush1.msra.mxu0 0.0
    %757 = vmatprep.subr.mxu0 0.0
    %758 = vmatpush1.msra.mxu0 0.0
    %759 = vmatprep.subr.mxu0 0.0
    %760 = vmatpush1.msra.mxu0 0.0
    %761 = vmatprep.mubr.f32.mxu0 0.0
    %762 = vmatmul.mubr.f32.gmra.mrb[0].mxu0 %v695
    %v763 = vpop.f32.mrb[0].mxu0
    %v764 = vadd.f32 0.0, %v763
    %v765 = vpop.f32.mrb[0].mxu0
    %766 = vdwg.mxu0
    %v767 = vsel %vm387, %v512, 0
    %769 = vmatprep.subr.mxu0 0.0
    %770 = vmatpush1.msra.mxu0 %v546
    %771 = vmatprep.subr.mxu0 0.0
    %772 = vmatpush1.msra.mxu0 0.0
    %773 = vmatprep.subr.mxu0 0.0
    %774 = vmatpush1.msra.mxu0 0.0
    %775 = vmatprep.subr.mxu0 0.0
    %776 = vmatpush1.msra.mxu0 0.0
    %777 = vmatprep.subr.mxu0 0.0
    %778 = vmatpush1.msra.mxu0 0.0
    %779 = vmatprep.subr.mxu0 0.0
    %780 = vmatpush1.msra.mxu0 0.0
    %781 = vmatprep.subr.mxu0 0.0
    %782 = vmatpush1.msra.mxu0 0.0
    %783 = vmatprep.subr.mxu0 0.0
    %784 = vmatpush1.msra.mxu0 0.0
    %785 = vmatprep.subr.mxu0 0.0
    %786 = vmatpush1.msra.mxu0 0.0
    %787 = vmatprep.subr.mxu0 0.0
    %788 = vmatpush1.msra.mxu0 0.0
    %789 = vmatprep.subr.mxu0 0.0
    %790 = vmatpush1.msra.mxu0 0.0
    %791 = vmatprep.subr.mxu0 0.0
    %792 = vmatpush1.msra.mxu0 0.0
    %793 = vmatprep.subr.mxu0 0.0
    %794 = vmatpush1.msra.mxu0 0.0
    %795 = vmatprep.subr.mxu0 0.0
    %796 = vmatpush1.msra.mxu0 0.0
    %797 = vmatprep.subr.mxu0 0.0
    %798 = vmatpush1.msra.mxu0 0.0
    %799 = vmatprep.subr.mxu0 0.0
    %800 = vmatpush1.msra.mxu0 0.0
    %801 = vmatprep.subr.mxu0 0.0
    %802 = vmatpush1.msra.mxu0 0.0
    %803 = vmatprep.subr.mxu0 0.0
    %804 = vmatpush1.msra.mxu0 0.0
    %805 = vmatprep.subr.mxu0 0.0
    %806 = vmatpush1.msra.mxu0 0.0
    %807 = vmatprep.subr.mxu0 0.0
    %808 = vmatpush1.msra.mxu0 0.0
    %809 = vmatprep.subr.mxu0 0.0
    %810 = vmatpush1.msra.mxu0 0.0
    %811 = vmatprep.subr.mxu0 0.0
    %812 = vmatpush1.msra.mxu0 0.0
    %813 = vmatprep.subr.mxu0 0.0
    %814 = vmatpush1.msra.mxu0 0.0
    %815 = vmatprep.subr.mxu0 0.0
    %816 = vmatpush1.msra.mxu0 0.0
    %817 = vmatprep.subr.mxu0 0.0
    %818 = vmatpush1.msra.mxu0 0.0
    %819 = vmatprep.subr.mxu0 0.0
    %820 = vmatpush1.msra.mxu0 0.0
    %821 = vmatprep.subr.mxu0 0.0
    %822 = vmatpush1.msra.mxu0 0.0
    %823 = vmatprep.subr.mxu0 0.0
    %824 = vmatpush1.msra.mxu0 0.0
    %825 = vmatprep.subr.mxu0 0.0
    %826 = vmatpush1.msra.mxu0 0.0
    %827 = vmatprep.subr.mxu0 0.0
    %828 = vmatpush1.msra.mxu0 0.0
    %829 = vmatprep.subr.mxu0 0.0
    %830 = vmatpush1.msra.mxu0 0.0
    %831 = vmatprep.subr.mxu0 0.0
    %832 = vmatpush1.msra.mxu0 0.0
    %833 = vmatprep.mubr.f32.mxu0 0.0
    %834 = vmatmul.mubr.f32.gmra.mrb[0].mxu0 %v767
    %v835 = vpop.f32.mrb[0].mxu0
    %v836 = vadd.f32 0.0, %v835
    %v837 = vpop.f32.mrb[0].mxu0
    %838 = vdwg.mxu0
    %v839 = vsel %vm387, %v516, 0
    %841 = vmatprep.subr.mxu0 0.0
    %842 = vmatpush1.msra.mxu0 %v547
    %843 = vmatprep.subr.mxu0 0.0
    %844 = vmatpush1.msra.mxu0 0.0
    %845 = vmatprep.subr.mxu0 0.0
    %846 = vmatpush1.msra.mxu0 0.0
    %847 = vmatprep.subr.mxu0 0.0
    %848 = vmatpush1.msra.mxu0 0.0
    %849 = vmatprep.subr.mxu0 0.0
    %850 = vmatpush1.msra.mxu0 0.0
    %851 = vmatprep.subr.mxu0 0.0
    %852 = vmatpush1.msra.mxu0 0.0
    %853 = vmatprep.subr.mxu0 0.0
    %854 = vmatpush1.msra.mxu0 0.0
    %855 = vmatprep.subr.mxu0 0.0
    %856 = vmatpush1.msra.mxu0 0.0
    %857 = vmatprep.subr.mxu0 0.0
    %858 = vmatpush1.msra.mxu0 0.0
    %859 = vmatprep.subr.mxu0 0.0
    %860 = vmatpush1.msra.mxu0 0.0
    %861 = vmatprep.subr.mxu0 0.0
    %862 = vmatpush1.msra.mxu0 0.0
    %863 = vmatprep.subr.mxu0 0.0
    %864 = vmatpush1.msra.mxu0 0.0
    %865 = vmatprep.subr.mxu0 0.0
    %866 = vmatpush1.msra.mxu0 0.0
    %867 = vmatprep.subr.mxu0 0.0
    %868 = vmatpush1.msra.mxu0 0.0
    %869 = vmatprep.subr.mxu0 0.0
    %870 = vmatpush1.msra.mxu0 0.0
    %871 = vmatprep.subr.mxu0 0.0
    %872 = vmatpush1.msra.mxu0 0.0
    %873 = vmatprep.subr.mxu0 0.0
    %874 = vmatpush1.msra.mxu0 0.0
    %875 = vmatprep.subr.mxu0 0.0
    %876 = vmatpush1.msra.mxu0 0.0
    %877 = vmatprep.subr.mxu0 0.0
    %878 = vmatpush1.msra.mxu0 0.0
    %879 = vmatprep.subr.mxu0 0.0
    %880 = vmatpush1.msra.mxu0 0.0
    %881 = vmatprep.subr.mxu0 0.0
    %882 = vmatpush1.msra.mxu0 0.0
    %883 = vmatprep.subr.mxu0 0.0
    %884 = vmatpush1.msra.mxu0 0.0
    %885 = vmatprep.subr.mxu0 0.0
    %886 = vmatpush1.msra.mxu0 0.0
    %887 = vmatprep.subr.mxu0 0.0
    %888 = vmatpush1.msra.mxu0 0.0
    %889 = vmatprep.subr.mxu0 0.0
    %890 = vmatpush1.msra.mxu0 0.0
    %891 = vmatprep.subr.mxu0 0.0
    %892 = vmatpush1.msra.mxu0 0.0
    %893 = vmatprep.subr.mxu0 0.0
    %894 = vmatpush1.msra.mxu0 0.0
    %895 = vmatprep.subr.mxu0 0.0
    %896 = vmatpush1.msra.mxu0 0.0
    %897 = vmatprep.subr.mxu0 0.0
    %898 = vmatpush1.msra.mxu0 0.0
    %899 = vmatprep.subr.mxu0 0.0
    %900 = vmatpush1.msra.mxu0 0.0
    %901 = vmatprep.subr.mxu0 0.0
    %902 = vmatpush1.msra.mxu0 0.0
    %903 = vmatprep.subr.mxu0 0.0
    %904 = vmatpush1.msra.mxu0 0.0
    %905 = vmatprep.mubr.f32.mxu0 0.0
    %906 = vmatmul.mubr.f32.gmra.mrb[0].mxu0 %v839
    %v907 = vpop.f32.mrb[0].mxu0
    %v908 = vadd.f32 0.0, %v907
    %v909 = vpop.f32.mrb[0].mxu0
    %910 = vdwg.mxu0
    %v911 = vsel %vm387, %v520, 0
    %913 = vmatprep.subr.mxu0 0.0
    %914 = vmatpush1.msra.mxu0 %v548
    %915 = vmatprep.subr.mxu0 0.0
    %916 = vmatpush1.msra.mxu0 0.0
    %917 = vmatprep.subr.mxu0 0.0
    %918 = vmatpush1.msra.mxu0 0.0
    %919 = vmatprep.subr.mxu0 0.0
    %920 = vmatpush1.msra.mxu0 0.0
    %921 = vmatprep.subr.mxu0 0.0
    %922 = vmatpush1.msra.mxu0 0.0
    %923 = vmatprep.subr.mxu0 0.0
    %924 = vmatpush1.msra.mxu0 0.0
    %925 = vmatprep.subr.mxu0 0.0
    %926 = vmatpush1.msra.mxu0 0.0
    %927 = vmatprep.subr.mxu0 0.0
    %928 = vmatpush1.msra.mxu0 0.0
    %929 = vmatprep.subr.mxu0 0.0
    %930 = vmatpush1.msra.mxu0 0.0
    %931 = vmatprep.subr.mxu0 0.0
    %932 = vmatpush1.msra.mxu0 0.0
    %933 = vmatprep.subr.mxu0 0.0
    %934 = vmatpush1.msra.mxu0 0.0
    %935 = vmatprep.subr.mxu0 0.0
    %936 = vmatpush1.msra.mxu0 0.0
    %937 = vmatprep.subr.mxu0 0.0
    %938 = vmatpush1.msra.mxu0 0.0
    %939 = vmatprep.subr.mxu0 0.0
    %940 = vmatpush1.msra.mxu0 0.0
    %941 = vmatprep.subr.mxu0 0.0
    %942 = vmatpush1.msra.mxu0 0.0
    %943 = vmatprep.subr.mxu0 0.0
    %944 = vmatpush1.msra.mxu0 0.0
    %945 = vmatprep.subr.mxu0 0.0
    %946 = vmatpush1.msra.mxu0 0.0
    %947 = vmatprep.subr.mxu0 0.0
    %948 = vmatpush1.msra.mxu0 0.0
    %949 = vmatprep.subr.mxu0 0.0
    %950 = vmatpush1.msra.mxu0 0.0
    %951 = vmatprep.subr.mxu0 0.0
    %952 = vmatpush1.msra.mxu0 0.0
    %953 = vmatprep.subr.mxu0 0.0
    %954 = vmatpush1.msra.mxu0 0.0
    %955 = vmatprep.subr.mxu0 0.0
    %956 = vmatpush1.msra.mxu0 0.0
    %957 = vmatprep.subr.mxu0 0.0
    %958 = vmatpush1.msra.mxu0 0.0
    %959 = vmatprep.subr.mxu0 0.0
    %960 = vmatpush1.msra.mxu0 0.0
    %961 = vmatprep.subr.mxu0 0.0
    %962 = vmatpush1.msra.mxu0 0.0
    %963 = vmatprep.subr.mxu0 0.0
    %964 = vmatpush1.msra.mxu0 0.0
    %965 = vmatprep.subr.mxu0 0.0
    %966 = vmatpush1.msra.mxu0 0.0
    %967 = vmatprep.subr.mxu0 0.0
    %968 = vmatpush1.msra.mxu0 0.0
    %969 = vmatprep.subr.mxu0 0.0
    %970 = vmatpush1.msra.mxu0 0.0
    %971 = vmatprep.subr.mxu0 0.0
    %972 = vmatpush1.msra.mxu0 0.0
    %973 = vmatprep.subr.mxu0 0.0
    %974 = vmatpush1.msra.mxu0 0.0
    %975 = vmatprep.subr.mxu0 0.0
    %976 = vmatpush1.msra.mxu0 0.0
    %977 = vmatprep.mubr.f32.mxu0 0.0
    %978 = vmatmul.mubr.f32.gmra.mrb[0].mxu0 %v911
    %v979 = vpop.f32.mrb[0].mxu0
    %v980 = vadd.f32 0.0, %v979
    %v981 = vpop.f32.mrb[0].mxu0
    %982 = vdwg.mxu0
    %v983 = vsel %vm387, %v524, 0
    %985 = vmatprep.subr.mxu0 0.0
    %986 = vmatpush1.msra.mxu0 %v549
    %987 = vmatprep.subr.mxu0 0.0
    %988 = vmatpush1.msra.mxu0 0.0
    %989 = vmatprep.subr.mxu0 0.0
    %990 = vmatpush1.msra.mxu0 0.0
    %991 = vmatprep.subr.mxu0 0.0
    %992 = vmatpush1.msra.mxu0 0.0
    %993 = vmatprep.subr.mxu0 0.0
    %994 = vmatpush1.msra.mxu0 0.0
    %995 = vmatprep.subr.mxu0 0.0
    %996 = vmatpush1.msra.mxu0 0.0
    %997 = vmatprep.subr.mxu0 0.0
    %998 = vmatpush1.msra.mxu0 0.0
    %999 = vmatprep.subr.mxu0 0.0
    %1000 = vmatpush1.msra.mxu0 0.0
    %1001 = vmatprep.subr.mxu0 0.0
    %1002 = vmatpush1.msra.mxu0 0.0
    %1003 = vmatprep.subr.mxu0 0.0
    %1004 = vmatpush1.msra.mxu0 0.0
    %1005 = vmatprep.subr.mxu0 0.0
    %1006 = vmatpush1.msra.mxu0 0.0
    %1007 = vmatprep.subr.mxu0 0.0
    %1008 = vmatpush1.msra.mxu0 0.0
    %1009 = vmatprep.subr.mxu0 0.0
    %1010 = vmatpush1.msra.mxu0 0.0
    %1011 = vmatprep.subr.mxu0 0.0
    %1012 = vmatpush1.msra.mxu0 0.0
    %1013 = vmatprep.subr.mxu0 0.0
    %1014 = vmatpush1.msra.mxu0 0.0
    %1015 = vmatprep.subr.mxu0 0.0
    %1016 = vmatpush1.msra.mxu0 0.0
    %1017 = vmatprep.subr.mxu0 0.0
    %1018 = vmatpush1.msra.mxu0 0.0
    %1019 = vmatprep.subr.mxu0 0.0
    %1020 = vmatpush1.msra.mxu0 0.0
    %1021 = vmatprep.subr.mxu0 0.0
    %1022 = vmatpush1.msra.mxu0 0.0
    %1023 = vmatprep.subr.mxu0 0.0
    %1024 = vmatpush1.msra.mxu0 0.0
    %1025 = vmatprep.subr.mxu0 0.0
    %1026 = vmatpush1.msra.mxu0 0.0
    %1027 = vmatprep.subr.mxu0 0.0
    %1028 = vmatpush1.msra.mxu0 0.0
    %1029 = vmatprep.subr.mxu0 0.0
    %1030 = vmatpush1.msra.mxu0 0.0
    %1031 = vmatprep.subr.mxu0 0.0
    %1032 = vmatpush1.msra.mxu0 0.0
    %1033 = vmatprep.subr.mxu0 0.0
    %1034 = vmatpush1.msra.mxu0 0.0
    %1035 = vmatprep.subr.mxu0 0.0
    %1036 = vmatpush1.msra.mxu0 0.0
    %1037 = vmatprep.subr.mxu0 0.0
    %1038 = vmatpush1.msra.mxu0 0.0
    %1039 = vmatprep.subr.mxu0 0.0
    %1040 = vmatpush1.msra.mxu0 0.0
    %1041 = vmatprep.subr.mxu0 0.0
    %1042 = vmatpush1.msra.mxu0 0.0
    %1043 = vmatprep.subr.mxu0 0.0
    %1044 = vmatpush1.msra.mxu0 0.0
    %1045 = vmatprep.subr.mxu0 0.0
    %1046 = vmatpush1.msra.mxu0 0.0
    %1047 = vmatprep.subr.mxu0 0.0
    %1048 = vmatpush1.msra.mxu0 0.0
    %1049 = vmatprep.mubr.f32.mxu0 0.0
    %1050 = vmatmul.mubr.f32.gmra.mrb[0].mxu0 %v983
    %v1051 = vpop.f32.mrb[0].mxu0
    %v1052 = vadd.f32 0.0, %v1051
    %v1053 = vpop.f32.mrb[0].mxu0
    %1054 = vdwg.mxu0
    %v1055 = vsel %vm387, %v528, 0
    %1057 = vmatprep.subr.mxu0 0.0
    %1058 = vmatpush1.msra.mxu0 %v550
    %1059 = vmatprep.subr.mxu0 0.0
    %1060 = vmatpush1.msra.mxu0 0.0
    %1061 = vmatprep.subr.mxu0 0.0
    %1062 = vmatpush1.msra.mxu0 0.0
    %1063 = vmatprep.subr.mxu0 0.0
    %1064 = vmatpush1.msra.mxu0 0.0
    %1065 = vmatprep.subr.mxu0 0.0
    %1066 = vmatpush1.msra.mxu0 0.0
    %1067 = vmatprep.subr.mxu0 0.0
    %1068 = vmatpush1.msra.mxu0 0.0
    %1069 = vmatprep.subr.mxu0 0.0
    %1070 = vmatpush1.msra.mxu0 0.0
    %1071 = vmatprep.subr.mxu0 0.0
    %1072 = vmatpush1.msra.mxu0 0.0
    %1073 = vmatprep.subr.mxu0 0.0
    %1074 = vmatpush1.msra.mxu0 0.0
    %1075 = vmatprep.subr.mxu0 0.0
    %1076 = vmatpush1.msra.mxu0 0.0
    %1077 = vmatprep.subr.mxu0 0.0
    %1078 = vmatpush1.msra.mxu0 0.0
    %1079 = vmatprep.subr.mxu0 0.0
    %1080 = vmatpush1.msra.mxu0 0.0
    %1081 = vmatprep.subr.mxu0 0.0
    %1082 = vmatpush1.msra.mxu0 0.0
    %1083 = vmatprep.subr.mxu0 0.0
    %1084 = vmatpush1.msra.mxu0 0.0
    %1085 = vmatprep.subr.mxu0 0.0
    %1086 = vmatpush1.msra.mxu0 0.0
    %1087 = vmatprep.subr.mxu0 0.0
    %1088 = vmatpush1.msra.mxu0 0.0
    %1089 = vmatprep.subr.mxu0 0.0
    %1090 = vmatpush1.msra.mxu0 0.0
    %1091 = vmatprep.subr.mxu0 0.0
    %1092 = vmatpush1.msra.mxu0 0.0
    %1093 = vmatprep.subr.mxu0 0.0
    %1094 = vmatpush1.msra.mxu0 0.0
    %1095 = vmatprep.subr.mxu0 0.0
    %1096 = vmatpush1.msra.mxu0 0.0
    %1097 = vmatprep.subr.mxu0 0.0
    %1098 = vmatpush1.msra.mxu0 0.0
    %1099 = vmatprep.subr.mxu0 0.0
    %1100 = vmatpush1.msra.mxu0 0.0
    %1101 = vmatprep.subr.mxu0 0.0
    %1102 = vmatpush1.msra.mxu0 0.0
    %1103 = vmatprep.subr.mxu0 0.0
    %1104 = vmatpush1.msra.mxu0 0.0
    %1105 = vmatprep.subr.mxu0 0.0
    %1106 = vmatpush1.msra.mxu0 0.0
    %1107 = vmatprep.subr.mxu0 0.0
    %1108 = vmatpush1.msra.mxu0 0.0
    %1109 = vmatprep.subr.mxu0 0.0
    %1110 = vmatpush1.msra.mxu0 0.0
    %1111 = vmatprep.subr.mxu0 0.0
    %1112 = vmatpush1.msra.mxu0 0.0
    %1113 = vmatprep.subr.mxu0 0.0
    %1114 = vmatpush1.msra.mxu0 0.0
    %1115 = vmatprep.subr.mxu0 0.0
    %1116 = vmatpush1.msra.mxu0 0.0
    %1117 = vmatprep.subr.mxu0 0.0
    %1118 = vmatpush1.msra.mxu0 0.0
    %1119 = vmatprep.subr.mxu0 0.0
    %1120 = vmatpush1.msra.mxu0 0.0
    %1121 = vmatprep.mubr.f32.mxu0 0.0
    %1122 = vmatmul.mubr.f32.gmra.mrb[0].mxu0 %v1055
    %v1123 = vpop.f32.mrb[0].mxu0
    %v1124 = vadd.f32 0.0, %v1123
    %v1125 = vpop.f32.mrb[0].mxu0
    %1126 = vdwg.mxu0
    %v1128 = vcombine.high %v394, %v394
    %v1130 = vunpack.c.l.s4 1966171168
    %v1131 = vunpack.c.0.s8 %v1130
    %v1132 = vlaneseq
    %v1133 = vshrl.u32 %v1132, 7
    %v1134 = vsub.s32 %v1131, %v1133
    %v1135 = vrot.slane %v394, %v1134
    %v1137 = vunpack.c.l.s4 1966171168
    %v1138 = vunpack.c.0.s8 %v1137
    %v1139 = vlaneseq
    %v1140 = vshrl.u32 %v1139, 7
    %v1141 = vsub.s32 %v1138, %v1140
    %v1142 = vrot.slane %v1128, %v1141
    %v1143 = vcombine.high %v1135, %v1135
    %v1144 = vcombine.high %v1142, %v1142
    %v1146 = vunpack.c.l.s4 1966171168
    %v1147 = vunpack.c.0.s8 %v1146
    %v1148 = vlaneseq
    %v1149 = vshrl.u32 %v1148, 7
    %v1150 = vsub.s32 %v1147, %v1149
    %v1151 = vrot.slane %v1135, %v1150
    %v1153 = vunpack.c.l.s4 1966171168
    %v1154 = vunpack.c.0.s8 %v1153
    %v1155 = vlaneseq
    %v1156 = vshrl.u32 %v1155, 7
    %v1157 = vsub.s32 %v1154, %v1156
    %v1158 = vrot.slane %v1142, %v1157
    %v1160 = vunpack.c.l.s4 1966171168
    %v1161 = vunpack.c.0.s8 %v1160
    %v1162 = vlaneseq
    %v1163 = vshrl.u32 %v1162, 7
    %v1164 = vsub.s32 %v1161, %v1163
    %v1165 = vrot.slane %v1143, %v1164
    %v1167 = vunpack.c.l.s4 1966171168
    %v1168 = vunpack.c.0.s8 %v1167
    %v1169 = vlaneseq
    %v1170 = vshrl.u32 %v1169, 7
    %v1171 = vsub.s32 %v1168, %v1170
    %v1172 = vrot.slane %v1144, %v1171
    %v1173 = vcombine.high %v1151, %v1151
    %v1174 = vcombine.high %v1158, %v1158
    %v1175 = vcombine.high %v1165, %v1165
    %v1176 = vcombine.high %v1172, %v1172
    %v1177 = vld [vmem:[#allocation4] sm:$0x1]
    %v1178 = vld [vmem:[#allocation4 + $0x1] sm:$0x1]
    %v1179 = vld [vmem:[#allocation4 + $0x2] sm:$0x1]
    %v1180 = vld [vmem:[#allocation4 + $0x3] sm:$0x1]
    %v1181 = vld [vmem:[#allocation4 + $0x4] sm:$0x1]
    %v1182 = vld [vmem:[#allocation4 + $0x5] sm:$0x1]
    %v1183 = vld [vmem:[#allocation4 + $0x6] sm:$0x1]
    %v1184 = vld [vmem:[#allocation4 + $0x7] sm:$0x1]
    %1185 = vset.pattern.permute.xlu0 0
    %1186 = vperm.xlu0 %1185, %v1151
    %v1187 = vpop.permute.xlu0 %1186
    %v1189 = vlaneseq
    %v1190 = vshrl.u32 %v1189, 7
    %v1191 = vsub.s32 0, %v1190
    %v1192 = vrot.slane %v1187, %v1191
    %1193 = vset.pattern.permute.xlu0 0
    %1194 = vperm.xlu0 %1193, %v1165
    %v1195 = vpop.permute.xlu0 %1194
    %v1197 = vlaneseq
    %v1198 = vshrl.u32 %v1197, 7
    %v1199 = vsub.s32 0, %v1198
    %v1200 = vrot.slane %v1195, %v1199
    %1201 = vset.pattern.permute.xlu0 0
    %1202 = vperm.xlu0 %1201, %v1173
    %v1203 = vpop.permute.xlu0 %1202
    %v1205 = vlaneseq
    %v1206 = vshrl.u32 %v1205, 7
    %v1207 = vsub.s32 0, %v1206
    %v1208 = vrot.slane %v1203, %v1207
    %1209 = vset.pattern.permute.xlu0 0
    %1210 = vperm.xlu0 %1209, %v1175
    %v1211 = vpop.permute.xlu0 %1210
    %v1213 = vlaneseq
    %v1214 = vshrl.u32 %v1213, 7
    %v1215 = vsub.s32 0, %v1214
    %v1216 = vrot.slane %v1211, %v1215
    %1217 = vset.pattern.permute.xlu0 0
    %1218 = vperm.xlu0 %1217, %v1158
    %v1219 = vpop.permute.xlu0 %1218
    %v1221 = vlaneseq
    %v1222 = vshrl.u32 %v1221, 7
    %v1223 = vsub.s32 0, %v1222
    %v1224 = vrot.slane %v1219, %v1223
    %1225 = vset.pattern.permute.xlu0 0
    %1226 = vperm.xlu0 %1225, %v1172
    %v1227 = vpop.permute.xlu0 %1226
    %v1229 = vlaneseq
    %v1230 = vshrl.u32 %v1229, 7
    %v1231 = vsub.s32 0, %v1230
    %v1232 = vrot.slane %v1227, %v1231
    %1233 = vset.pattern.permute.xlu0 0
    %1234 = vperm.xlu0 %1233, %v1174
    %v1235 = vpop.permute.xlu0 %1234
    %v1237 = vlaneseq
    %v1238 = vshrl.u32 %v1237, 7
    %v1239 = vsub.s32 0, %v1238
    %v1240 = vrot.slane %v1235, %v1239
    %1241 = vset.pattern.permute.xlu0 0
    %1242 = vperm.xlu0 %1241, %v1176
    %v1243 = vpop.permute.xlu0 %1242
    %v1245 = vlaneseq
    %v1246 = vshrl.u32 %v1245, 7
    %v1247 = vsub.s32 0, %v1246
    %v1248 = vrot.slane %v1243, %v1247
    %v1249 = vmul.f32 %v1192, %v1177
    %v1250 = vmul.f32 %v1200, %v1178
    %v1251 = vmul.f32 %v1208, %v1179
    %v1252 = vmul.f32 %v1216, %v1180
    %v1253 = vmul.f32 %v1224, %v1181
    %v1254 = vmul.f32 %v1232, %v1182
    %v1255 = vmul.f32 %v1240, %v1183
    %v1256 = vmul.f32 %v1248, %v1184
    %v1257 = vadd.f32 %v1249, %v620
    %v1258 = vadd.f32 %v1250, %v692
    %v1259 = vadd.f32 %v1251, %v764
    %v1260 = vadd.f32 %v1252, %v836
    %v1261 = vadd.f32 %v1253, %v908
    %v1262 = vadd.f32 %v1254, %v980
    %v1263 = vadd.f32 %v1255, %v1052
    %v1264 = vadd.f32 %v1256, %v1124
    %vm1265 = vcmask 122880
    %1266 = vst.msk [vmem:[#allocation4] sm:$0x1] %vm1265, %v1257
    %1267 = vst.msk [vmem:[#allocation4 + $0x1] sm:$0x1] %vm1265, %v1258
    %1268 = vst.msk [vmem:[#allocation4 + $0x2] sm:$0x1] %vm1265, %v1259
    %1269 = vst.msk [vmem:[#allocation4 + $0x3] sm:$0x1] %vm1265, %v1260
    %1270 = vst.msk [vmem:[#allocation4 + $0x4] sm:$0x1] %vm1265, %v1261
    %1271 = vst.msk [vmem:[#allocation4 + $0x5] sm:$0x1] %vm1265, %v1262
    %1272 = vst.msk [vmem:[#allocation4 + $0x6] sm:$0x1] %vm1265, %v1263
    %1273 = vst.msk [vmem:[#allocation4 + $0x7] sm:$0x1] %vm1265, %v1264
    %1274 = vst.msk [vmem:[#allocation2] sm:$0xff] %vm541, %v391
    // Predicated region
    $region38: #{tpu_custom_call.1} parent=1 // pred_check
      %p1275 = pneg %p60
    $region39: #{tpu_custom_call.1} parent=1 // pred_check_branch
      %1277 = sbr.rel (%p1275) target = $region41
    $region40: #{tpu_custom_call.1} parent=1 // pred_region
      %v1278 = vld [vmem:[#allocation3] sm:$0xff]
      %v1279 = vrcp.pop %v1278
      %v1280 = vmul.f32 1.0, %v1279
      %v1281 = vld [vmem:[#allocation4] sm:$0x1]
      %v1282 = vld [vmem:[#allocation4 + $0x1] sm:$0x1]
      %v1283 = vld [vmem:[#allocation4 + $0x2] sm:$0x1]
      %v1284 = vld [vmem:[#allocation4 + $0x3] sm:$0x1]
      %v1285 = vld [vmem:[#allocation4 + $0x4] sm:$0x1]
      %v1286 = vld [vmem:[#allocation4 + $0x5] sm:$0x1]
      %v1287 = vld [vmem:[#allocation4 + $0x6] sm:$0x1]
      %v1288 = vld [vmem:[#allocation4 + $0x7] sm:$0x1]
      %1290 = vset.pattern.permute.xlu0 0
      %1291 = vperm.xlu0 %1290, %v1280
      %v1292 = vpop.permute.xlu0 %1291
      %v1293 = vlaneseq
      %v1294 = vshrl.u32 %v1293, 7
      %v1295 = vsub.s32 0, %v1294
      %v1296 = vrot.slane %v1292, %v1295
      %v1297 = vlaneseq
      %v1298 = vshrl.u32 %v1297, 7
      %v1299 = vsub.s32 1, %v1298
      %v1300 = vrot.slane %v1292, %v1299
      %v1301 = vlaneseq
      %v1302 = vshrl.u32 %v1301, 7
      %v1303 = vsub.s32 2, %v1302
      %v1304 = vrot.slane %v1292, %v1303
      %v1305 = vlaneseq
      %v1306 = vshrl.u32 %v1305, 7
      %v1307 = vsub.s32 3, %v1306
      %v1308 = vrot.slane %v1292, %v1307
      %v1309 = vlaneseq
      %v1310 = vshrl.u32 %v1309, 7
      %v1311 = vsub.s32 4, %v1310
      %v1312 = vrot.slane %v1292, %v1311
      %v1313 = vlaneseq
      %v1314 = vshrl.u32 %v1313, 7
      %v1315 = vsub.s32 5, %v1314
      %v1316 = vrot.slane %v1292, %v1315
      %v1317 = vlaneseq
      %v1318 = vshrl.u32 %v1317, 7
      %v1319 = vsub.s32 6, %v1318
      %v1320 = vrot.slane %v1292, %v1319
      %v1321 = vlaneseq
      %v1322 = vshrl.u32 %v1321, 7
      %v1323 = vsub.s32 7, %v1322
      %v1324 = vrot.slane %v1292, %v1323
      %v1333 = vmul.f32 %v1281, %v1296
      %v1334 = vmul.f32 %v1282, %v1300
      %v1335 = vmul.f32 %v1283, %v1304
      %v1336 = vmul.f32 %v1284, %v1308
      %v1337 = vmul.f32 %v1285, %v1312
      %v1338 = vmul.f32 %v1286, %v1316
      %v1339 = vmul.f32 %v1287, %v1320
      %v1340 = vmul.f32 %v1288, %v1324
      %v1349 = vcombine.low %v1333, %v1334
      %v1350 = vcombine.low %v1335, %v1336
      %v1351 = vcombine.low %v1337, %v1338
      %v1352 = vcombine.low %v1339, %v1340
      %v1354 = vunpack.c.l.s4 1966171168
      %v1355 = vunpack.c.0.s8 %v1354
      %v1356 = vlaneseq
      %v1357 = vshrl.u32 %v1356, 7
      %v1358 = vsub.s32 %v1355, %v1357
      %v1359 = vrot.slane %v1349, %v1358
      %v1361 = vunpack.c.l.s4 1966171168
      %v1362 = vunpack.c.0.s8 %v1361
      %v1363 = vlaneseq
      %v1364 = vshrl.u32 %v1363, 7
      %v1365 = vsub.s32 %v1362, %v1364
      %v1366 = vrot.slane %v1350, %v1365
      %v1368 = vunpack.c.l.s4 1966171168
      %v1369 = vunpack.c.0.s8 %v1368
      %v1370 = vlaneseq
      %v1371 = vshrl.u32 %v1370, 7
      %v1372 = vsub.s32 %v1369, %v1371
      %v1373 = vrot.slane %v1351, %v1372
      %v1375 = vunpack.c.l.s4 1966171168
      %v1376 = vunpack.c.0.s8 %v1375
      %v1377 = vlaneseq
      %v1378 = vshrl.u32 %v1377, 7
      %v1379 = vsub.s32 %v1376, %v1378
      %v1380 = vrot.slane %v1352, %v1379
      %v1381 = vcombine.low %v1359, %v1366
      %v1382 = vcombine.low %v1373, %v1380
      %v1384 = vunpack.c.l.s4 1966171168
      %v1385 = vunpack.c.0.s8 %v1384
      %v1386 = vlaneseq
      %v1387 = vshrl.u32 %v1386, 7
      %v1388 = vsub.s32 %v1385, %v1387
      %v1389 = vrot.slane %v1381, %v1388
      %v1391 = vunpack.c.l.s4 1966171168
      %v1392 = vunpack.c.0.s8 %v1391
      %v1393 = vlaneseq
      %v1394 = vshrl.u32 %v1393, 7
      %v1395 = vsub.s32 %v1392, %v1394
      %v1396 = vrot.slane %v1382, %v1395
      %v1397 = vcombine.low %v1389, %v1396
      %vm1399 = vcmask 130048
      %1400 = vst.msk [vmem:[#allocation11] sm:$0xff] %vm1399, %v1397
    $region41: #{tpu_custom_call.1} parent=1 // pred_fallthru
      _
    // Predicated region
    $region42: #{tpu_custom_call.1} parent=1 // pred_check
      _
    $region43: #{tpu_custom_call.1} parent=1 // pred_check_branch
      %1402 = sbr.rel (0) target = $region45
    $region44: #{tpu_custom_call.1} parent=1 // pred_region
      %s1404 = ssub.s32 128, 128
      %1405 = vsyncadd [#allocation7], %s1404
      %s1407 = sshll.u32 [#allocation11], 4
      %s1408 = int_to_ptr.vmem [resolvable:$true] %s1407
      %1410 = dma.vmem_to_hbm [thread:$0]  %s1408, 128, %s5, [#allocation7]
    $region45: #{tpu_custom_call.1} parent=1 // pred_fallthru
      _
    // Predicated region
    $region46: #{tpu_custom_call.1} parent=1 // pred_check
      _
    $region47: #{tpu_custom_call.1} parent=1 // pred_check_branch
      %1412 = sbr.rel (0) target = $region49
    $region48: #{tpu_custom_call.1} parent=1 // pred_region
      %1413 = dma.done [#allocation7], 128
    $region49: #{tpu_custom_call.1} parent=1 // pred_fallthru
      _
    %1414 = vsyncpa [#allocation6], 1
    %1415 = vsyncpa [#allocation9], 1
    %1416 = vsyncpa [#allocation7], 1

</llo_original>
